<compile_context>
chip_gen: v5e
topology: v5e:2x2
jax: 0.10.0
libtpu: 0.0.40
codegen_flags: <defaults>
</compile_context>

<pallas_src>
import functools

import jax
import jax.numpy as jnp
import numpy as np
from jax import lax
from jax.experimental import pallas as pl
from jax.experimental.pallas import tpu as pltpu

_SUB, _LANE = 8, 128
_CHUNK = _SUB * _LANE  # 1024 voxels == one packed (8,128) f32 vreg per per-voxel scalar


def _k2(i, j):
    return (i, j) if i <= j else (j, i)


def _eigen_kernel(dwi_ref, noise_ref, evals_ref, evecs_ref, *,
                  winv, min_diff, n_sweeps):
    """One grid step = `cpb` chunks of 1024 voxels, each packed as (8,128) vregs.

    dwi_ref:   (cpb, G, 8, 128)  raw DWI signal
    noise_ref: (cpb, 6, 8, 128)  pre-symmetrized eps-scaled noise (xx, xy, xz, yy, yz, zz)
    evals_ref: (cpb, 3, 8, 128)  descending eigenvalues
    evecs_ref: (cpb, 9, 8, 128)  plane 3*i+j = component i of eigenvector j (columns = evecs)
    """
    cpb = dwi_ref.shape[0]
    G = dwi_ref.shape[1]

    # Hoisted splats: one broadcast each for the whole grid step.
    zero = jnp.zeros((_SUB, _LANE), jnp.float32)
    one = jnp.ones((_SUB, _LANE), jnp.float32)

    def fit_and_build(c):
        # Streamed log-linear DTI fit: logd_g lives for one g-iteration only; 6 accumulators.
        # winv entries are static floats (nn.Parameter, requires_grad=False) -> VPU MACs.
        acc = [None] * 6
        for g in range(G):
            logd = jnp.log(jnp.maximum(dwi_ref[c, g], min_diff))
            for k in range(6):
                term = float(winv[k, g]) * logd
                acc[k] = term if acc[k] is None else acc[k] + term
        # design-matrix column order (dipy): Dxx, Dxy, Dyy, Dxz, Dyz, Dzz, (lnS0 unused)
        # noise plane order:                  xx,  xy,  xz,  yy,  yz,  zz
        A = {(0, 0): acc[0] + noise_ref[c, 0],
             (0, 1): acc[1] + noise_ref[c, 1],
             (0, 2): acc[3] + noise_ref[c, 2],
             (1, 1): acc[2] + noise_ref[c, 3],
             (1, 2): acc[4] + noise_ref[c, 4],
             (2, 2): acc[5] + noise_ref[c, 5]}
        V = [[one, zero, zero],
             [zero, one, zero],
             [zero, zero, one]]
        return A, V

    def rotate(A, V, p, q, last):
        app, aqq, apq = A[(p, p)], A[(q, q)], A[(p, q)]
        diff = aqq - app
        sgn = jnp.where(diff >= 0.0, 1.0, -1.0)
        two_apq = apq + apq
        denom = (jnp.abs(diff)
                 + jnp.sqrt(diff * diff + two_apq * two_apq) + 1e-37)
        inv = pl.reciprocal(denom, approx=True)      # EUP
        inv = inv * (2.0 - denom * inv)              # one Newton step (cheap, off the EUP path)
        t = (two_apq * sgn) * inv
        c_ = lax.rsqrt(t * t + 1.0)
        s_ = t * c_
        tapq = t * apq
        nA = dict(A)
        nA[(p, p)] = app - tapq
        nA[(q, q)] = aqq + tapq
        if not last:
            # Off-diagonal updates are dead after the final rotation of the last sweep.
            r = 3 - p - q
            arp, arq = A[_k2(r, p)], A[_k2(r, q)]
            nA[(p, q)] = zero
            nA[_k2(r, p)] = c_ * arp - s_ * arq
            nA[_k2(r, q)] = s_ * arp + c_ * arq
        nV = [row[:] for row in V]
        for i in range(3):
            vip, viq = V[i][p], V[i][q]
            nV[i][p] = c_ * vip - s_ * viq
            nV[i][q] = s_ * vip + c_ * viq
        return nA, nV

    def finalize(c, A, V):
        evals = [A[(0, 0)], A[(1, 1)], A[(2, 2)]]
        # descending sort with matched eigenvector columns (3-element sort network)
        for (i, j) in ((0, 1), (0, 2), (1, 2)):
            swap = evals[i] < evals[j]
            ei = jnp.where(swap, evals[j], evals[i])
            ej = jnp.where(swap, evals[i], evals[j])
            evals[i], evals[j] = ei, ej
            for row in range(3):
                vi = jnp.where(swap, V[row][j], V[row][i])
                vj = jnp.where(swap, V[row][i], V[row][j])
                V[row][i], V[row][j] = vi, vj
        # eigenvals.clamp(min=min_diffusivity); eigenvals[isnan] = 0 (eigenvalues only,
        # matching the torch module); whole-vreg plane stores, no stacking.
        for k in range(3):
            clamped = jnp.maximum(evals[k], min_diff)
            evals_ref[c, k] = jnp.where(jnp.isnan(clamped), 0.0, clamped)
        for i in range(3):
            for j in range(3):
                evecs_ref[c, 3 * i + j] = V[i][j]

    rotations = [(p, q) for _ in range(n_sweeps) for (p, q) in ((0, 1), (0, 2), (1, 2))]
    n_rot = len(rotations)

    def process(chunk_ids):
        # Build both chunks' states, then run each rotation on both back-to-back so the
        # scheduler can interleave the two independent latency chains.
        states = [fit_and_build(c) for c in chunk_ids]
        for ridx, (p, q) in enumerate(rotations):
            last = ridx == n_rot - 1
            states = [rotate(A, V, p, q, last) for (A, V) in states]
        for c, (A, V) in zip(chunk_ids, states):
            finalize(c, A, V)

    # Two-chunk interleave (static unroll; chunk indices are Python ints).
    for pc in range(cpb // 2):
        process((2 * pc, 2 * pc + 1))
    if cpb % 2:
        process((cpb - 1,))


def eigen_module_forward(dwi, design_matrix_inv, noise, min_diffusivity,
                         chunks_per_block=16, n_sweeps=4):
    """dwi: (..., G); design_matrix_inv: (7, G) static; noise: (M, 9) pre-scaled by eps."""
    lead = dwi.shape[:-1]
    G = dwi.shape[-1]
    M = int(np.prod(lead)) if lead else 1

    winv = np.asarray(design_matrix_inv, dtype=np.float32)
    if winv.shape != (7, G):
        raise ValueError(f"design_matrix_inv must be (7, {G}), got {winv.shape}")

    n_chunks = max(1, int(pl.cdiv(M, _CHUNK)))
    cpb = max(1, min(int(chunks_per_block), n_chunks))
    n_blocks = int(pl.cdiv(n_chunks, cpb))
    if n_blocks > 1 and n_blocks % 2:
        # v7x: even grid-step count so the "parallel" axis splits across both TensorCores;
        # rebalance cpb instead of appending a fully padded block.
        n_blocks += 1
        cpb = max(1, int(pl.cdiv(n_chunks, n_blocks)))
    nc = n_blocks * cpb
    Mp = nc * _CHUNK
    pad = Mp - M

    dwi2 = jnp.asarray(dwi).reshape(M, G).astype(jnp.float32)
    noise2 = jnp.asarray(noise).reshape(M, 9).astype(jnp.float32)
    # Pre-symmetrize the SymEig regularization noise to its 6 unique components; this fuses
    # into the packing copy below and cuts kernel noise traffic from 36 to 24 B/voxel.
    nsym = jnp.stack([noise2[:, 0],
                      0.5 * (noise2[:, 1] + noise2[:, 3]),
                      0.5 * (noise2[:, 2] + noise2[:, 6]),
                      noise2[:, 4],
                      0.5 * (noise2[:, 5] + noise2[:, 7]),
                      noise2[:, 8]], axis=-1)                           # (M, 6)
    if pad:
        dwi2 = jnp.pad(dwi2, ((0, pad), (0, 0)), constant_values=1.0)   # log(1)=0, benign
        nsym = jnp.pad(nsym, ((0, pad), (0, 0)))

    # Sublane-pack the voxel axis: voxel m = chunk*1024 + sub*128 + lane.  Under jit the
    # pad+reshape+transpose fuses into a single copy per array (the only host-side relayout;
    # production callers should keep tensors persistently in this packed layout instead).
    dwi4 = dwi2.reshape(nc, _SUB, _LANE, G).transpose(0, 3, 1, 2)       # (nc, G, 8, 128)
    noise4 = nsym.reshape(nc, _SUB, _LANE, 6).transpose(0, 3, 1, 2)     # (nc, 6, 8, 128)

    kernel = functools.partial(_eigen_kernel, winv=winv,
                               min_diff=float(min_diffusivity),
                               n_sweeps=int(n_sweeps))

    evals4, evecs4 = pl.pallas_call(
        kernel,
        out_shape=(jax.ShapeDtypeStruct((nc, 3, _SUB, _LANE), jnp.float32),
                   jax.ShapeDtypeStruct((nc, 9, _SUB, _LANE), jnp.float32)),
        grid_spec=pltpu.PrefetchScalarGridSpec(
            num_scalar_prefetch=0,
            grid=(n_blocks,),
            # If profiling on v5e shows exposed input DMA, add
            # pipeline_mode=pl.Buffered(3) to the dwi spec below.
            in_specs=[pl.BlockSpec((cpb, G, _SUB, _LANE), lambda i: (i, 0, 0, 0)),
                      pl.BlockSpec((cpb, 6, _SUB, _LANE), lambda i: (i, 0, 0, 0))],
            out_specs=[pl.BlockSpec((cpb, 3, _SUB, _LANE), lambda i: (i, 0, 0, 0)),
                       pl.BlockSpec((cpb, 9, _SUB, _LANE), lambda i: (i, 0, 0, 0))]),
        compiler_params=pltpu.CompilerParams(
            dimension_semantics=("parallel",)),
    )(dwi4, noise4)

    evals = evals4.transpose(0, 2, 3, 1).reshape(Mp, 3)[:M].reshape(*lead, 3)
    evecs = evecs4.transpose(0, 2, 3, 1).reshape(Mp, 9)[:M].reshape(*lead, 3, 3)
    return {"evals": evals, "evecs": evecs}


def _make_gtab(n_grad):
    """Deterministic synthetic gradient table: 2 b0 volumes + golden-spiral directions."""
    bvals = np.zeros(n_grad, dtype=np.float64)
    bvals[2:] = 1000.0
    bvecs = np.zeros((n_grad, 3), dtype=np.float64)
    m = n_grad - 2
    idx = np.arange(m) + 0.5
    phi = np.arccos(1.0 - 2.0 * idx / m)
    theta = np.pi * (1.0 + 5.0 ** 0.5) * idx
    bvecs[2:, 0] = np.sin(phi) * np.cos(theta)
    bvecs[2:, 1] = np.sin(phi) * np.sin(theta)
    bvecs[2:, 2] = np.cos(phi)
    return bvals, bvecs


def _design_matrix(bvals, bvecs):
    """Same layout as dipy.reconst.dti.design_matrix (columns Dxx,Dxy,Dyy,Dxz,Dyz,Dzz,1)."""
    gx, gy, gz = bvecs[:, 0], bvecs[:, 1], bvecs[:, 2]
    B = np.stack([gx * gx * bvals,
                  2.0 * gx * gy * bvals,
                  gy * gy * bvals,
                  2.0 * gx * gz * bvals,
                  2.0 * gy * gz * bvals,
                  gz * gz * bvals,
                  np.ones_like(bvals)], axis=1)
    return -B


if __name__ == "__main__":
    # Small shapes consistent with the module: dwi = (batch, H, W, n_grad)
    B_, H_, W_, G = 2, 8, 8, 16
    eps = 1e-6
    tol = 1e-6

    bvals, bvecs = _make_gtab(G)
    design = _design_matrix(bvals, bvecs)                     # (G, 7)
    design_inv = np.linalg.pinv(design).astype(np.float32)    # (7, G) -- nn.Parameter equiv.
    min_diffusivity = float(tol / -design.min())

    key = jax.random.PRNGKey(0)
    k_dwi, k_noise = jax.random.split(key)
    dwi = jax.random.uniform(k_dwi, (B_, H_, W_, G), jnp.float32, 0.05, 1.0)
    # torch.randn noise (regularization in SymEig), generated deterministically here.
    noise = jax.random.normal(k_noise, (B_ * H_ * W_, 9), jnp.float32) * eps

    fwd = jax.jit(lambda d, n: eigen_module_forward(d, design_inv, n, min_diffusivity))
    out = jax.block_until_ready(fwd(dwi, noise))

    evals = np.asarray(out["evals"])
    evecs = np.asarray(out["evecs"])
    assert evals.shape == (B_, H_, W_, 3)
    assert evecs.shape == (B_, H_, W_, 3, 3)
    assert np.isfinite(evals).all() and np.isfinite(evecs).all()

    # Validate the 4-sweep Jacobi (approx-reciprocal + Newton) against jnp.linalg.eigh.
    d_ref = jnp.maximum(dwi, min_diffusivity)
    logd_ref = jnp.log(d_ref)
    fit_ref = jnp.sum(jnp.asarray(design_inv)[None, None, None] * logd_ref[..., None, :],
                      axis=-1)
    lt = np.array([[0, 1, 3], [1, 2, 4], [3, 4, 5]])
    X = fit_ref[..., lt] + noise.reshape(B_, H_, W_, 3, 3)
    X = 0.5 * (X + jnp.swapaxes(X, -1, -2))
    w_ref, _ = jnp.linalg.eigh(X)
    w_ref = w_ref[..., ::-1]                                  # descending
    w_ref = jnp.maximum(w_ref, min_diffusivity)
    w_ref = jnp.where(jnp.isnan(w_ref), 0.0, w_ref)
    np.testing.assert_allclose(evals, np.asarray(w_ref), rtol=5e-3, atol=1e-7)

    # Eigenvector columns should be orthonormal.
    vtv = np.einsum('...ki,...kj->...ij', evecs, evecs)
    assert np.max(np.abs(vtv - np.eye(3, dtype=np.float32))) < 1e-3

    # TODO(synk): backward-pass gradient clipping hook (SymEig.hook) is training-only; not implemented.
    print("KERNEL_OK")
</pallas_src>

<mosaic_0001>
module attributes {stable_mosaic.version = 11 : i64} {
  func.func @_eigen_kernel(%arg0: i32, %arg1: memref<1x16x8x128xf32, #tpu.memory_space<vmem>>, %arg2: memref<1x6x8x128xf32, #tpu.memory_space<vmem>>, %arg3: memref<1x3x8x128xf32, #tpu.memory_space<vmem>>, %arg4: memref<1x9x8x128xf32, #tpu.memory_space<vmem>>) attributes {dimension_semantics = [#tpu.dimension_semantics<parallel>], iteration_bounds = array<i64: 1>, scalar_prefetch = 0 : i64, scratch_operands = 0 : i64, tpu.core_type = #tpu.core_type<tc>, window_params = [{transform_indices = @transform_0, window_bounds = array<i64: 1, 16, 8, 128>}, {transform_indices = @transform_1, window_bounds = array<i64: 1, 6, 8, 128>}, {transform_indices = @transform_2, window_bounds = array<i64: 1, 3, 8, 128>}, {transform_indices = @transform_3, window_bounds = array<i64: 1, 9, 8, 128>}]} {
    %cst = arith.constant 0.000000e+00 : f32
    %0 = vector.broadcast %cst : f32 to vector<8x128xf32>
    %cst_0 = arith.constant 1.000000e+00 : f32
    %1 = vector.broadcast %cst_0 : f32 to vector<8x128xf32>
    %c0 = arith.constant 0 : index
    %c0_1 = arith.constant 0 : index
    %c0_2 = arith.constant 0 : index
    %c0_3 = arith.constant 0 : index
    %2 = vector.load %arg1[%c0, %c0_1, %c0_2, %c0_3] : memref<1x16x8x128xf32, #tpu.memory_space<vmem>>, vector<1x1x8x128xf32>
    %3 = vector.shape_cast %2 : vector<1x1x8x128xf32> to vector<8x128xf32>
    %cst_4 = arith.constant 1.01353226E-9 : f32
    %4 = vector.broadcast %cst_4 : f32 to vector<8x128xf32>
    %5 = arith.maximumf %3, %4 : vector<8x128xf32>
    %6 = math.log %5 : vector<8x128xf32>
    %cst_5 = arith.constant 5.000000e-04 : f32
    %7 = vector.broadcast %cst_5 : f32 to vector<8x128xf32>
    %8 = arith.mulf %7, %6 : vector<8x128xf32>
    %cst_6 = arith.constant -1.08452934E-16 : f32
    %9 = vector.broadcast %cst_6 : f32 to vector<8x128xf32>
    %10 = arith.mulf %9, %6 : vector<8x128xf32>
    %cst_7 = arith.constant 5.000000e-04 : f32
    %11 = vector.broadcast %cst_7 : f32 to vector<8x128xf32>
    %12 = arith.mulf %11, %6 : vector<8x128xf32>
    %cst_8 = arith.constant -3.96399706E-17 : f32
    %13 = vector.broadcast %cst_8 : f32 to vector<8x128xf32>
    %14 = arith.mulf %13, %6 : vector<8x128xf32>
    %cst_9 = arith.constant 3.42878904E-17 : f32
    %15 = vector.broadcast %cst_9 : f32 to vector<8x128xf32>
    %16 = arith.mulf %15, %6 : vector<8x128xf32>
    %cst_10 = arith.constant 5.000000e-04 : f32
    %17 = vector.broadcast %cst_10 : f32 to vector<8x128xf32>
    %18 = arith.mulf %17, %6 : vector<8x128xf32>
    %c0_11 = arith.constant 0 : index
    %c1 = arith.constant 1 : index
    %c0_12 = arith.constant 0 : index
    %c0_13 = arith.constant 0 : index
    %19 = vector.load %arg1[%c0_11, %c1, %c0_12, %c0_13] : memref<1x16x8x128xf32, #tpu.memory_space<vmem>>, vector<1x1x8x128xf32>
    %20 = vector.shape_cast %19 : vector<1x1x8x128xf32> to vector<8x128xf32>
    %cst_14 = arith.constant 1.01353226E-9 : f32
    %21 = vector.broadcast %cst_14 : f32 to vector<8x128xf32>
    %22 = arith.maximumf %20, %21 : vector<8x128xf32>
    %23 = math.log %22 : vector<8x128xf32>
    %cst_15 = arith.constant 5.000000e-04 : f32
    %24 = vector.broadcast %cst_15 : f32 to vector<8x128xf32>
    %25 = arith.mulf %24, %23 : vector<8x128xf32>
    %26 = arith.addf %8, %25 : vector<8x128xf32>
    %cst_16 = arith.constant -1.08424426E-16 : f32
    %27 = vector.broadcast %cst_16 : f32 to vector<8x128xf32>
    %28 = arith.mulf %27, %23 : vector<8x128xf32>
    %29 = arith.addf %10, %28 : vector<8x128xf32>
    %cst_17 = arith.constant 5.000000e-04 : f32
    %30 = vector.broadcast %cst_17 : f32 to vector<8x128xf32>
    %31 = arith.mulf %30, %23 : vector<8x128xf32>
    %32 = arith.addf %12, %31 : vector<8x128xf32>
    %cst_18 = arith.constant -3.96362715E-17 : f32
    %33 = vector.broadcast %cst_18 : f32 to vector<8x128xf32>
    %34 = arith.mulf %33, %23 : vector<8x128xf32>
    %35 = arith.addf %14, %34 : vector<8x128xf32>
    %cst_19 = arith.constant 3.43096022E-17 : f32
    %36 = vector.broadcast %cst_19 : f32 to vector<8x128xf32>
    %37 = arith.mulf %36, %23 : vector<8x128xf32>
    %38 = arith.addf %16, %37 : vector<8x128xf32>
    %cst_20 = arith.constant 5.000000e-04 : f32
    %39 = vector.broadcast %cst_20 : f32 to vector<8x128xf32>
    %40 = arith.mulf %39, %23 : vector<8x128xf32>
    %41 = arith.addf %18, %40 : vector<8x128xf32>
    %c0_21 = arith.constant 0 : index
    %c2 = arith.constant 2 : index
    %c0_22 = arith.constant 0 : index
    %c0_23 = arith.constant 0 : index
    %42 = vector.load %arg1[%c0_21, %c2, %c0_22, %c0_23] : memref<1x16x8x128xf32, #tpu.memory_space<vmem>>, vector<1x1x8x128xf32>
    %43 = vector.shape_cast %42 : vector<1x1x8x128xf32> to vector<8x128xf32>
    %cst_24 = arith.constant 1.01353226E-9 : f32
    %44 = vector.broadcast %cst_24 : f32 to vector<8x128xf32>
    %45 = arith.maximumf %43, %44 : vector<8x128xf32>
    %46 = math.log %45 : vector<8x128xf32>
    %cst_25 = arith.constant 9.95002701E-5 : f32
    %47 = vector.broadcast %cst_25 : f32 to vector<8x128xf32>
    %48 = arith.mulf %47, %46 : vector<8x128xf32>
    %49 = arith.addf %26, %48 : vector<8x128xf32>
    %cst_26 = arith.constant 2.53120925E-5 : f32
    %50 = vector.broadcast %cst_26 : f32 to vector<8x128xf32>
    %51 = arith.mulf %50, %46 : vector<8x128xf32>
    %52 = arith.addf %29, %51 : vector<8x128xf32>
    %cst_27 = arith.constant 4.77390277E-5 : f32
    %53 = vector.broadcast %cst_27 : f32 to vector<8x128xf32>
    %54 = arith.mulf %53, %46 : vector<8x128xf32>
    %55 = arith.addf %32, %54 : vector<8x128xf32>
    %cst_28 = arith.constant -9.60201359E-5 : f32
    %56 = vector.broadcast %cst_28 : f32 to vector<8x128xf32>
    %57 = arith.mulf %56, %46 : vector<8x128xf32>
    %58 = arith.addf %35, %57 : vector<8x128xf32>
    %cst_29 = arith.constant 1.55853239E-4 : f32
    %59 = vector.broadcast %cst_29 : f32 to vector<8x128xf32>
    %60 = arith.mulf %59, %46 : vector<8x128xf32>
    %61 = arith.addf %38, %60 : vector<8x128xf32>
    %cst_30 = arith.constant -3.65680578E-4 : f32
    %62 = vector.broadcast %cst_30 : f32 to vector<8x128xf32>
    %63 = arith.mulf %62, %46 : vector<8x128xf32>
    %64 = arith.addf %41, %63 : vector<8x128xf32>
    %c0_31 = arith.constant 0 : index
    %c3 = arith.constant 3 : index
    %c0_32 = arith.constant 0 : index
    %c0_33 = arith.constant 0 : index
    %65 = vector.load %arg1[%c0_31, %c3, %c0_32, %c0_33] : memref<1x16x8x128xf32, #tpu.memory_space<vmem>>, vector<1x1x8x128xf32>
    %66 = vector.shape_cast %65 : vector<1x1x8x128xf32> to vector<8x128xf32>
    %cst_34 = arith.constant 1.01353226E-9 : f32
    %67 = vector.broadcast %cst_34 : f32 to vector<8x128xf32>
    %68 = arith.maximumf %66, %67 : vector<8x128xf32>
    %69 = math.log %68 : vector<8x128xf32>
    %cst_35 = arith.constant -5.89145129E-5 : f32
    %70 = vector.broadcast %cst_35 : f32 to vector<8x128xf32>
    %71 = arith.mulf %70, %69 : vector<8x128xf32>
    %72 = arith.addf %49, %71 : vector<8x128xf32>
    %cst_36 = arith.constant 8.09246339E-5 : f32
    %73 = vector.broadcast %cst_36 : f32 to vector<8x128xf32>
    %74 = arith.mulf %73, %69 : vector<8x128xf32>
    %75 = arith.addf %52, %74 : vector<8x128xf32>
    %cst_37 = arith.constant 6.21873332E-5 : f32
    %76 = vector.broadcast %cst_37 : f32 to vector<8x128xf32>
    %77 = arith.mulf %76, %69 : vector<8x128xf32>
    %78 = arith.addf %55, %77 : vector<8x128xf32>
    %cst_38 = arith.constant 2.13070278E-4 : f32
    %79 = vector.broadcast %cst_38 : f32 to vector<8x128xf32>
    %80 = arith.mulf %79, %69 : vector<8x128xf32>
    %81 = arith.addf %58, %80 : vector<8x128xf32>
    %cst_39 = arith.constant -1.23851918E-4 : f32
    %82 = vector.broadcast %cst_39 : f32 to vector<8x128xf32>
    %83 = arith.mulf %82, %69 : vector<8x128xf32>
    %84 = arith.addf %61, %83 : vector<8x128xf32>
    %cst_40 = arith.constant -2.08916186E-4 : f32
    %85 = vector.broadcast %cst_40 : f32 to vector<8x128xf32>
    %86 = arith.mulf %85, %69 : vector<8x128xf32>
    %87 = arith.addf %64, %86 : vector<8x128xf32>
    %c0_41 = arith.constant 0 : index
    %c4 = arith.constant 4 : index
    %c0_42 = arith.constant 0 : index
    %c0_43 = arith.constant 0 : index
    %88 = vector.load %arg1[%c0_41, %c4, %c0_42, %c0_43] : memref<1x16x8x128xf32, #tpu.memory_space<vmem>>, vector<1x1x8x128xf32>
    %89 = vector.shape_cast %88 : vector<1x1x8x128xf32> to vector<8x128xf32>
    %cst_44 = arith.constant 1.01353226E-9 : f32
    %90 = vector.broadcast %cst_44 : f32 to vector<8x128xf32>
    %91 = arith.maximumf %89, %90 : vector<8x128xf32>
    %92 = math.log %91 : vector<8x128xf32>
    %cst_45 = arith.constant -1.69620558E-4 : f32
    %93 = vector.broadcast %cst_45 : f32 to vector<8x128xf32>
    %94 = arith.mulf %93, %92 : vector<8x128xf32>
    %95 = arith.addf %72, %94 : vector<8x128xf32>
    %cst_46 = arith.constant -8.30354111E-5 : f32
    %96 = vector.broadcast %cst_46 : f32 to vector<8x128xf32>
    %97 = arith.mulf %96, %92 : vector<8x128xf32>
    %98 = arith.addf %75, %97 : vector<8x128xf32>
    %cst_47 = arith.constant 9.4246061E-5 : f32
    %99 = vector.broadcast %cst_47 : f32 to vector<8x128xf32>
    %100 = arith.mulf %99, %92 : vector<8x128xf32>
    %101 = arith.addf %78, %100 : vector<8x128xf32>
    %cst_48 = arith.constant -2.61620909E-4 : f32
    %102 = vector.broadcast %cst_48 : f32 to vector<8x128xf32>
    %103 = arith.mulf %102, %92 : vector<8x128xf32>
    %104 = arith.addf %81, %103 : vector<8x128xf32>
    %cst_49 = arith.constant -7.78802059E-5 : f32
    %105 = vector.broadcast %cst_49 : f32 to vector<8x128xf32>
    %106 = arith.mulf %105, %92 : vector<8x128xf32>
    %107 = arith.addf %84, %106 : vector<8x128xf32>
    %cst_50 = arith.constant -1.5733391E-4 : f32
    %108 = vector.broadcast %cst_50 : f32 to vector<8x128xf32>
    %109 = arith.mulf %108, %92 : vector<8x128xf32>
    %110 = arith.addf %87, %109 : vector<8x128xf32>
    %c0_51 = arith.constant 0 : index
    %c5 = arith.constant 5 : index
    %c0_52 = arith.constant 0 : index
    %c0_53 = arith.constant 0 : index
    %111 = vector.load %arg1[%c0_51, %c5, %c0_52, %c0_53] : memref<1x16x8x128xf32, #tpu.memory_space<vmem>>, vector<1x1x8x128xf32>
    %112 = vector.shape_cast %111 : vector<1x1x8x128xf32> to vector<8x128xf32>
    %cst_54 = arith.constant 1.01353226E-9 : f32
    %113 = vector.broadcast %cst_54 : f32 to vector<8x128xf32>
    %114 = arith.maximumf %112, %113 : vector<8x128xf32>
    %115 = math.log %114 : vector<8x128xf32>
    %cst_55 = arith.constant -6.453120e-06 : f32
    %116 = vector.broadcast %cst_55 : f32 to vector<8x128xf32>
    %117 = arith.mulf %116, %115 : vector<8x128xf32>
    %118 = arith.addf %95, %117 : vector<8x128xf32>
    %cst_56 = arith.constant -1.75752968E-4 : f32
    %119 = vector.broadcast %cst_56 : f32 to vector<8x128xf32>
    %120 = arith.mulf %119, %115 : vector<8x128xf32>
    %121 = arith.addf %98, %120 : vector<8x128xf32>
    %cst_57 = arith.constant -1.92020379E-4 : f32
    %122 = vector.broadcast %cst_57 : f32 to vector<8x128xf32>
    %123 = arith.mulf %122, %115 : vector<8x128xf32>
    %124 = arith.addf %101, %123 : vector<8x128xf32>
    %cst_58 = arith.constant 1.17533746E-4 : f32
    %125 = vector.broadcast %cst_58 : f32 to vector<8x128xf32>
    %126 = arith.mulf %125, %115 : vector<8x128xf32>
    %127 = arith.addf %104, %126 : vector<8x128xf32>
    %cst_59 = arith.constant 1.94655891E-4 : f32
    %128 = vector.broadcast %cst_59 : f32 to vector<8x128xf32>
    %129 = arith.mulf %128, %115 : vector<8x128xf32>
    %130 = arith.addf %107, %129 : vector<8x128xf32>
    %cst_60 = arith.constant 2.26026577E-6 : f32
    %131 = vector.broadcast %cst_60 : f32 to vector<8x128xf32>
    %132 = arith.mulf %131, %115 : vector<8x128xf32>
    %133 = arith.addf %110, %132 : vector<8x128xf32>
    %c0_61 = arith.constant 0 : index
    %c6 = arith.constant 6 : index
    %c0_62 = arith.constant 0 : index
    %c0_63 = arith.constant 0 : index
    %134 = vector.load %arg1[%c0_61, %c6, %c0_62, %c0_63] : memref<1x16x8x128xf32, #tpu.memory_space<vmem>>, vector<1x1x8x128xf32>
    %135 = vector.shape_cast %134 : vector<1x1x8x128xf32> to vector<8x128xf32>
    %cst_64 = arith.constant 1.01353226E-9 : f32
    %136 = vector.broadcast %cst_64 : f32 to vector<8x128xf32>
    %137 = arith.maximumf %135, %136 : vector<8x128xf32>
    %138 = math.log %137 : vector<8x128xf32>
    %cst_65 = arith.constant 9.04455737E-5 : f32
    %139 = vector.broadcast %cst_65 : f32 to vector<8x128xf32>
    %140 = arith.mulf %139, %138 : vector<8x128xf32>
    %141 = arith.addf %118, %140 : vector<8x128xf32>
    %cst_66 = arith.constant 9.17577272E-5 : f32
    %142 = vector.broadcast %cst_66 : f32 to vector<8x128xf32>
    %143 = arith.mulf %142, %138 : vector<8x128xf32>
    %144 = arith.addf %121, %143 : vector<8x128xf32>
    %cst_67 = arith.constant -3.473870e-04 : f32
    %145 = vector.broadcast %cst_67 : f32 to vector<8x128xf32>
    %146 = arith.mulf %145, %138 : vector<8x128xf32>
    %147 = arith.addf %124, %146 : vector<8x128xf32>
    %cst_68 = arith.constant 3.76208227E-5 : f32
    %148 = vector.broadcast %cst_68 : f32 to vector<8x128xf32>
    %149 = arith.mulf %148, %138 : vector<8x128xf32>
    %150 = arith.addf %127, %149 : vector<8x128xf32>
    %cst_69 = arith.constant -1.73824825E-4 : f32
    %151 = vector.broadcast %cst_69 : f32 to vector<8x128xf32>
    %152 = arith.mulf %151, %138 : vector<8x128xf32>
    %153 = arith.addf %130, %152 : vector<8x128xf32>
    %cst_70 = arith.constant 3.49658949E-5 : f32
    %154 = vector.broadcast %cst_70 : f32 to vector<8x128xf32>
    %155 = arith.mulf %154, %138 : vector<8x128xf32>
    %156 = arith.addf %133, %155 : vector<8x128xf32>
    %c0_71 = arith.constant 0 : index
    %c7 = arith.constant 7 : index
    %c0_72 = arith.constant 0 : index
    %c0_73 = arith.constant 0 : index
    %157 = vector.load %arg1[%c0_71, %c7, %c0_72, %c0_73] : memref<1x16x8x128xf32, #tpu.memory_space<vmem>>, vector<1x1x8x128xf32>
    %158 = vector.shape_cast %157 : vector<1x1x8x128xf32> to vector<8x128xf32>
    %cst_74 = arith.constant 1.01353226E-9 : f32
    %159 = vector.broadcast %cst_74 : f32 to vector<8x128xf32>
    %160 = arith.maximumf %158, %159 : vector<8x128xf32>
    %161 = math.log %160 : vector<8x128xf32>
    %cst_75 = arith.constant -2.24645904E-4 : f32
    %162 = vector.broadcast %cst_75 : f32 to vector<8x128xf32>
    %163 = arith.mulf %162, %161 : vector<8x128xf32>
    %164 = arith.addf %141, %163 : vector<8x128xf32>
    %cst_76 = arith.constant 2.47292948E-4 : f32
    %165 = vector.broadcast %cst_76 : f32 to vector<8x128xf32>
    %166 = arith.mulf %165, %161 : vector<8x128xf32>
    %167 = arith.addf %144, %166 : vector<8x128xf32>
    %cst_77 = arith.constant -7.60614857E-5 : f32
    %168 = vector.broadcast %cst_77 : f32 to vector<8x128xf32>
    %169 = arith.mulf %168, %161 : vector<8x128xf32>
    %170 = arith.addf %147, %169 : vector<8x128xf32>
    %cst_78 = arith.constant -8.43545203E-5 : f32
    %171 = vector.broadcast %cst_78 : f32 to vector<8x128xf32>
    %172 = arith.mulf %171, %161 : vector<8x128xf32>
    %173 = arith.addf %150, %172 : vector<8x128xf32>
    %cst_79 = arith.constant 7.05304337E-5 : f32
    %174 = vector.broadcast %cst_79 : f32 to vector<8x128xf32>
    %175 = arith.mulf %174, %161 : vector<8x128xf32>
    %176 = arith.addf %153, %175 : vector<8x128xf32>
    %cst_80 = arith.constant 8.04149604E-5 : f32
    %177 = vector.broadcast %cst_80 : f32 to vector<8x128xf32>
    %178 = arith.mulf %177, %161 : vector<8x128xf32>
    %179 = arith.addf %156, %178 : vector<8x128xf32>
    %c0_81 = arith.constant 0 : index
    %c8 = arith.constant 8 : index
    %c0_82 = arith.constant 0 : index
    %c0_83 = arith.constant 0 : index
    %180 = vector.load %arg1[%c0_81, %c8, %c0_82, %c0_83] : memref<1x16x8x128xf32, #tpu.memory_space<vmem>>, vector<1x1x8x128xf32>
    %181 = vector.shape_cast %180 : vector<1x1x8x128xf32> to vector<8x128xf32>
    %cst_84 = arith.constant 1.01353226E-9 : f32
    %182 = vector.broadcast %cst_84 : f32 to vector<8x128xf32>
    %183 = arith.maximumf %181, %182 : vector<8x128xf32>
    %184 = math.log %183 : vector<8x128xf32>
    %cst_85 = arith.constant -4.17481235E-4 : f32
    %185 = vector.broadcast %cst_85 : f32 to vector<8x128xf32>
    %186 = arith.mulf %185, %184 : vector<8x128xf32>
    %187 = arith.addf %164, %186 : vector<8x128xf32>
    %cst_86 = arith.constant -5.49116703E-5 : f32
    %188 = vector.broadcast %cst_86 : f32 to vector<8x128xf32>
    %189 = arith.mulf %188, %184 : vector<8x128xf32>
    %190 = arith.addf %167, %189 : vector<8x128xf32>
    %cst_87 = arith.constant 9.84658981E-5 : f32
    %191 = vector.broadcast %cst_87 : f32 to vector<8x128xf32>
    %192 = arith.mulf %191, %184 : vector<8x128xf32>
    %193 = arith.addf %170, %192 : vector<8x128xf32>
    %cst_88 = arith.constant 4.52555942E-5 : f32
    %194 = vector.broadcast %cst_88 : f32 to vector<8x128xf32>
    %195 = arith.mulf %194, %184 : vector<8x128xf32>
    %196 = arith.addf %173, %195 : vector<8x128xf32>
    %cst_89 = arith.constant 9.42154292E-6 : f32
    %197 = vector.broadcast %cst_89 : f32 to vector<8x128xf32>
    %198 = arith.mulf %197, %184 : vector<8x128xf32>
    %199 = arith.addf %176, %198 : vector<8x128xf32>
    %cst_90 = arith.constant 1.14289571E-4 : f32
    %200 = vector.broadcast %cst_90 : f32 to vector<8x128xf32>
    %201 = arith.mulf %200, %184 : vector<8x128xf32>
    %202 = arith.addf %179, %201 : vector<8x128xf32>
    %c0_91 = arith.constant 0 : index
    %c9 = arith.constant 9 : index
    %c0_92 = arith.constant 0 : index
    %c0_93 = arith.constant 0 : index
    %203 = vector.load %arg1[%c0_91, %c9, %c0_92, %c0_93] : memref<1x16x8x128xf32, #tpu.memory_space<vmem>>, vector<1x1x8x128xf32>
    %204 = vector.shape_cast %203 : vector<1x1x8x128xf32> to vector<8x128xf32>
    %cst_94 = arith.constant 1.01353226E-9 : f32
    %205 = vector.broadcast %cst_94 : f32 to vector<8x128xf32>
    %206 = arith.maximumf %204, %205 : vector<8x128xf32>
    %207 = math.log %206 : vector<8x128xf32>
    %cst_95 = arith.constant -1.23866907E-4 : f32
    %208 = vector.broadcast %cst_95 : f32 to vector<8x128xf32>
    %209 = arith.mulf %208, %207 : vector<8x128xf32>
    %210 = arith.addf %187, %209 : vector<8x128xf32>
    %cst_96 = arith.constant -2.61333858E-4 : f32
    %211 = vector.broadcast %cst_96 : f32 to vector<8x128xf32>
    %212 = arith.mulf %211, %207 : vector<8x128xf32>
    %213 = arith.addf %190, %212 : vector<8x128xf32>
    %cst_97 = arith.constant -1.9514843E-4 : f32
    %214 = vector.broadcast %cst_97 : f32 to vector<8x128xf32>
    %215 = arith.mulf %214, %207 : vector<8x128xf32>
    %216 = arith.addf %193, %215 : vector<8x128xf32>
    %cst_98 = arith.constant 3.37352358E-5 : f32
    %217 = vector.broadcast %cst_98 : f32 to vector<8x128xf32>
    %218 = arith.mulf %217, %207 : vector<8x128xf32>
    %219 = arith.addf %196, %218 : vector<8x128xf32>
    %cst_99 = arith.constant 3.16032965E-5 : f32
    %220 = vector.broadcast %cst_99 : f32 to vector<8x128xf32>
    %221 = arith.mulf %220, %207 : vector<8x128xf32>
    %222 = arith.addf %199, %221 : vector<8x128xf32>
    %cst_100 = arith.constant 1.14289571E-4 : f32
    %223 = vector.broadcast %cst_100 : f32 to vector<8x128xf32>
    %224 = arith.mulf %223, %207 : vector<8x128xf32>
    %225 = arith.addf %202, %224 : vector<8x128xf32>
    %c0_101 = arith.constant 0 : index
    %c10 = arith.constant 10 : index
    %c0_102 = arith.constant 0 : index
    %c0_103 = arith.constant 0 : index
    %226 = vector.load %arg1[%c0_101, %c10, %c0_102, %c0_103] : memref<1x16x8x128xf32, #tpu.memory_space<vmem>>, vector<1x1x8x128xf32>
    %227 = vector.shape_cast %226 : vector<1x1x8x128xf32> to vector<8x128xf32>
    %cst_104 = arith.constant 1.01353226E-9 : f32
    %228 = vector.broadcast %cst_104 : f32 to vector<8x128xf32>
    %229 = arith.maximumf %227, %228 : vector<8x128xf32>
    %230 = math.log %229 : vector<8x128xf32>
    %cst_105 = arith.constant 1.07489279E-4 : f32
    %231 = vector.broadcast %cst_105 : f32 to vector<8x128xf32>
    %232 = arith.mulf %231, %230 : vector<8x128xf32>
    %233 = arith.addf %210, %232 : vector<8x128xf32>
    %cst_106 = arith.constant 1.37891147E-5 : f32
    %234 = vector.broadcast %cst_106 : f32 to vector<8x128xf32>
    %235 = arith.mulf %234, %230 : vector<8x128xf32>
    %236 = arith.addf %213, %235 : vector<8x128xf32>
    %cst_107 = arith.constant -4.08196676E-4 : f32
    %237 = vector.broadcast %cst_107 : f32 to vector<8x128xf32>
    %238 = arith.mulf %237, %230 : vector<8x128xf32>
    %239 = arith.addf %216, %238 : vector<8x128xf32>
    %cst_108 = arith.constant 9.18352725E-6 : f32
    %240 = vector.broadcast %cst_108 : f32 to vector<8x128xf32>
    %241 = arith.mulf %240, %230 : vector<8x128xf32>
    %242 = arith.addf %219, %241 : vector<8x128xf32>
    %cst_109 = arith.constant -1.09571396E-4 : f32
    %243 = vector.broadcast %cst_109 : f32 to vector<8x128xf32>
    %244 = arith.mulf %243, %230 : vector<8x128xf32>
    %245 = arith.addf %222, %244 : vector<8x128xf32>
    %cst_110 = arith.constant 8.04149604E-5 : f32
    %246 = vector.broadcast %cst_110 : f32 to vector<8x128xf32>
    %247 = arith.mulf %246, %230 : vector<8x128xf32>
    %248 = arith.addf %225, %247 : vector<8x128xf32>
    %c0_111 = arith.constant 0 : index
    %c11 = arith.constant 11 : index
    %c0_112 = arith.constant 0 : index
    %c0_113 = arith.constant 0 : index
    %249 = vector.load %arg1[%c0_111, %c11, %c0_112, %c0_113] : memref<1x16x8x128xf32, #tpu.memory_space<vmem>>, vector<1x1x8x128xf32>
    %250 = vector.shape_cast %249 : vector<1x1x8x128xf32> to vector<8x128xf32>
    %cst_114 = arith.constant 1.01353226E-9 : f32
    %251 = vector.broadcast %cst_114 : f32 to vector<8x128xf32>
    %252 = arith.maximumf %250, %251 : vector<8x128xf32>
    %253 = math.log %252 : vector<8x128xf32>
    %cst_115 = arith.constant -1.16220901E-4 : f32
    %254 = vector.broadcast %cst_115 : f32 to vector<8x128xf32>
    %255 = arith.mulf %254, %253 : vector<8x128xf32>
    %256 = arith.addf %233, %255 : vector<8x128xf32>
    %cst_116 = arith.constant 2.37052227E-4 : f32
    %257 = vector.broadcast %cst_116 : f32 to vector<8x128xf32>
    %258 = arith.mulf %257, %253 : vector<8x128xf32>
    %259 = arith.addf %236, %258 : vector<8x128xf32>
    %cst_117 = arith.constant -1.40720498E-4 : f32
    %260 = vector.broadcast %cst_117 : f32 to vector<8x128xf32>
    %261 = arith.mulf %260, %253 : vector<8x128xf32>
    %262 = arith.addf %239, %261 : vector<8x128xf32>
    %cst_118 = arith.constant -1.20562712E-4 : f32
    %263 = vector.broadcast %cst_118 : f32 to vector<8x128xf32>
    %264 = arith.mulf %263, %253 : vector<8x128xf32>
    %265 = arith.addf %242, %264 : vector<8x128xf32>
    %cst_119 = arith.constant 1.30747954E-4 : f32
    %266 = vector.broadcast %cst_119 : f32 to vector<8x128xf32>
    %267 = arith.mulf %266, %253 : vector<8x128xf32>
    %268 = arith.addf %245, %267 : vector<8x128xf32>
    %cst_120 = arith.constant 3.49658949E-5 : f32
    %269 = vector.broadcast %cst_120 : f32 to vector<8x128xf32>
    %270 = arith.mulf %269, %253 : vector<8x128xf32>
    %271 = arith.addf %248, %270 : vector<8x128xf32>
    %c0_121 = arith.constant 0 : index
    %c12 = arith.constant 12 : index
    %c0_122 = arith.constant 0 : index
    %c0_123 = arith.constant 0 : index
    %272 = vector.load %arg1[%c0_121, %c12, %c0_122, %c0_123] : memref<1x16x8x128xf32, #tpu.memory_space<vmem>>, vector<1x1x8x128xf32>
    %273 = vector.shape_cast %272 : vector<1x1x8x128xf32> to vector<8x128xf32>
    %cst_124 = arith.constant 1.01353226E-9 : f32
    %274 = vector.broadcast %cst_124 : f32 to vector<8x128xf32>
    %275 = arith.maximumf %273, %274 : vector<8x128xf32>
    %276 = math.log %275 : vector<8x128xf32>
    %cst_125 = arith.constant -2.9602024E-4 : f32
    %277 = vector.broadcast %cst_125 : f32 to vector<8x128xf32>
    %278 = arith.mulf %277, %276 : vector<8x128xf32>
    %279 = arith.addf %256, %278 : vector<8x128xf32>
    %cst_126 = arith.constant 2.78238767E-5 : f32
    %280 = vector.broadcast %cst_126 : f32 to vector<8x128xf32>
    %281 = arith.mulf %280, %276 : vector<8x128xf32>
    %282 = arith.addf %259, %281 : vector<8x128xf32>
    %cst_127 = arith.constant 9.75467337E-5 : f32
    %283 = vector.broadcast %cst_127 : f32 to vector<8x128xf32>
    %284 = arith.mulf %283, %276 : vector<8x128xf32>
    %285 = arith.addf %262, %284 : vector<8x128xf32>
    %cst_128 = arith.constant 2.26837787E-4 : f32
    %286 = vector.broadcast %cst_128 : f32 to vector<8x128xf32>
    %287 = arith.mulf %286, %276 : vector<8x128xf32>
    %288 = arith.addf %265, %287 : vector<8x128xf32>
    %cst_129 = arith.constant -1.58023868E-5 : f32
    %289 = vector.broadcast %cst_129 : f32 to vector<8x128xf32>
    %290 = arith.mulf %289, %276 : vector<8x128xf32>
    %291 = arith.addf %268, %290 : vector<8x128xf32>
    %cst_130 = arith.constant 2.26026577E-6 : f32
    %292 = vector.broadcast %cst_130 : f32 to vector<8x128xf32>
    %293 = arith.mulf %292, %276 : vector<8x128xf32>
    %294 = arith.addf %271, %293 : vector<8x128xf32>
    %c0_131 = arith.constant 0 : index
    %c13 = arith.constant 13 : index
    %c0_132 = arith.constant 0 : index
    %c0_133 = arith.constant 0 : index
    %295 = vector.load %arg1[%c0_131, %c13, %c0_132, %c0_133] : memref<1x16x8x128xf32, #tpu.memory_space<vmem>>, vector<1x1x8x128xf32>
    %296 = vector.shape_cast %295 : vector<1x1x8x128xf32> to vector<8x128xf32>
    %cst_134 = arith.constant 1.01353226E-9 : f32
    %297 = vector.broadcast %cst_134 : f32 to vector<8x128xf32>
    %298 = arith.maximumf %296, %297 : vector<8x128xf32>
    %299 = math.log %298 : vector<8x128xf32>
    %cst_135 = arith.constant -7.11690736E-5 : f32
    %300 = vector.broadcast %cst_135 : f32 to vector<8x128xf32>
    %301 = arith.mulf %300, %299 : vector<8x128xf32>
    %302 = arith.addf %279, %301 : vector<8x128xf32>
    %cst_136 = arith.constant -1.52250592E-4 : f32
    %303 = vector.broadcast %cst_136 : f32 to vector<8x128xf32>
    %304 = arith.mulf %303, %299 : vector<8x128xf32>
    %305 = arith.addf %282, %304 : vector<8x128xf32>
    %cst_137 = arith.constant -4.20541619E-6 : f32
    %306 = vector.broadcast %cst_137 : f32 to vector<8x128xf32>
    %307 = arith.mulf %306, %299 : vector<8x128xf32>
    %308 = arith.addf %285, %307 : vector<8x128xf32>
    %cst_138 = arith.constant -2.14176762E-4 : f32
    %309 = vector.broadcast %cst_138 : f32 to vector<8x128xf32>
    %310 = arith.mulf %309, %299 : vector<8x128xf32>
    %311 = arith.addf %288, %310 : vector<8x128xf32>
    %cst_139 = arith.constant -1.69231047E-4 : f32
    %312 = vector.broadcast %cst_139 : f32 to vector<8x128xf32>
    %313 = arith.mulf %312, %299 : vector<8x128xf32>
    %314 = arith.addf %291, %313 : vector<8x128xf32>
    %cst_140 = arith.constant -1.5733391E-4 : f32
    %315 = vector.broadcast %cst_140 : f32 to vector<8x128xf32>
    %316 = arith.mulf %315, %299 : vector<8x128xf32>
    %317 = arith.addf %294, %316 : vector<8x128xf32>
    %c0_141 = arith.constant 0 : index
    %c14 = arith.constant 14 : index
    %c0_142 = arith.constant 0 : index
    %c0_143 = arith.constant 0 : index
    %318 = vector.load %arg1[%c0_141, %c14, %c0_142, %c0_143] : memref<1x16x8x128xf32, #tpu.memory_space<vmem>>, vector<1x1x8x128xf32>
    %319 = vector.shape_cast %318 : vector<1x1x8x128xf32> to vector<8x128xf32>
    %cst_144 = arith.constant 1.01353226E-9 : f32
    %320 = vector.broadcast %cst_144 : f32 to vector<8x128xf32>
    %321 = arith.maximumf %319, %320 : vector<8x128xf32>
    %322 = math.log %321 : vector<8x128xf32>
    %cst_145 = arith.constant 9.82787605E-5 : f32
    %323 = vector.broadcast %cst_145 : f32 to vector<8x128xf32>
    %324 = arith.mulf %323, %322 : vector<8x128xf32>
    %325 = arith.addf %302, %324 : vector<8x128xf32>
    %cst_146 = arith.constant -2.95882946E-5 : f32
    %326 = vector.broadcast %cst_146 : f32 to vector<8x128xf32>
    %327 = arith.mulf %326, %322 : vector<8x128xf32>
    %328 = arith.addf %305, %327 : vector<8x128xf32>
    %cst_147 = arith.constant -9.50059402E-5 : f32
    %329 = vector.broadcast %cst_147 : f32 to vector<8x128xf32>
    %330 = arith.mulf %329, %322 : vector<8x128xf32>
    %331 = arith.addf %308, %330 : vector<8x128xf32>
    %cst_148 = arith.constant 2.12243831E-5 : f32
    %332 = vector.broadcast %cst_148 : f32 to vector<8x128xf32>
    %333 = arith.mulf %332, %322 : vector<8x128xf32>
    %334 = arith.addf %311, %333 : vector<8x128xf32>
    %cst_149 = arith.constant 2.45535688E-4 : f32
    %335 = vector.broadcast %cst_149 : f32 to vector<8x128xf32>
    %336 = arith.mulf %335, %322 : vector<8x128xf32>
    %337 = arith.addf %314, %336 : vector<8x128xf32>
    %cst_150 = arith.constant -2.08916186E-4 : f32
    %338 = vector.broadcast %cst_150 : f32 to vector<8x128xf32>
    %339 = arith.mulf %338, %322 : vector<8x128xf32>
    %340 = arith.addf %317, %339 : vector<8x128xf32>
    %c0_151 = arith.constant 0 : index
    %c15 = arith.constant 15 : index
    %c0_152 = arith.constant 0 : index
    %c0_153 = arith.constant 0 : index
    %341 = vector.load %arg1[%c0_151, %c15, %c0_152, %c0_153] : memref<1x16x8x128xf32, #tpu.memory_space<vmem>>, vector<1x1x8x128xf32>
    %342 = vector.shape_cast %341 : vector<1x1x8x128xf32> to vector<8x128xf32>
    %cst_154 = arith.constant 1.01353226E-9 : f32
    %343 = vector.broadcast %cst_154 : f32 to vector<8x128xf32>
    %344 = arith.maximumf %342, %343 : vector<8x128xf32>
    %345 = math.log %344 : vector<8x128xf32>
    %cst_155 = arith.constant 8.86785564E-5 : f32
    %346 = vector.broadcast %cst_155 : f32 to vector<8x128xf32>
    %347 = arith.mulf %346, %345 : vector<8x128xf32>
    %348 = arith.addf %325, %347 : vector<8x128xf32>
    %cst_156 = arith.constant 3.29201721E-5 : f32
    %349 = vector.broadcast %cst_156 : f32 to vector<8x128xf32>
    %350 = arith.mulf %349, %345 : vector<8x128xf32>
    %351 = arith.addf %328, %350 : vector<8x128xf32>
    %cst_157 = arith.constant 5.85607413E-5 : f32
    %352 = vector.broadcast %cst_157 : f32 to vector<8x128xf32>
    %353 = arith.mulf %352, %345 : vector<8x128xf32>
    %354 = arith.addf %331, %353 : vector<8x128xf32>
    %cst_158 = arith.constant 7.22736658E-5 : f32
    %355 = vector.broadcast %cst_158 : f32 to vector<8x128xf32>
    %356 = arith.mulf %355, %345 : vector<8x128xf32>
    %357 = arith.addf %334, %356 : vector<8x128xf32>
    %cst_159 = arith.constant -1.68186249E-4 : f32
    %358 = vector.broadcast %cst_159 : f32 to vector<8x128xf32>
    %359 = arith.mulf %358, %345 : vector<8x128xf32>
    %360 = arith.addf %337, %359 : vector<8x128xf32>
    %cst_160 = arith.constant -3.65680578E-4 : f32
    %361 = vector.broadcast %cst_160 : f32 to vector<8x128xf32>
    %362 = arith.mulf %361, %345 : vector<8x128xf32>
    %363 = arith.addf %340, %362 : vector<8x128xf32>
    %c0_161 = arith.constant 0 : index
    %c0_162 = arith.constant 0 : index
    %c0_163 = arith.constant 0 : index
    %c0_164 = arith.constant 0 : index
    %364 = vector.load %arg2[%c0_161, %c0_162, %c0_163, %c0_164] : memref<1x6x8x128xf32, #tpu.memory_space<vmem>>, vector<1x1x8x128xf32>
    %365 = vector.shape_cast %364 : vector<1x1x8x128xf32> to vector<8x128xf32>
    %366 = arith.addf %348, %365 : vector<8x128xf32>
    %c0_165 = arith.constant 0 : index
    %c1_166 = arith.constant 1 : index
    %c0_167 = arith.constant 0 : index
    %c0_168 = arith.constant 0 : index
    %367 = vector.load %arg2[%c0_165, %c1_166, %c0_167, %c0_168] : memref<1x6x8x128xf32, #tpu.memory_space<vmem>>, vector<1x1x8x128xf32>
    %368 = vector.shape_cast %367 : vector<1x1x8x128xf32> to vector<8x128xf32>
    %369 = arith.addf %351, %368 : vector<8x128xf32>
    %c0_169 = arith.constant 0 : index
    %c2_170 = arith.constant 2 : index
    %c0_171 = arith.constant 0 : index
    %c0_172 = arith.constant 0 : index
    %370 = vector.load %arg2[%c0_169, %c2_170, %c0_171, %c0_172] : memref<1x6x8x128xf32, #tpu.memory_space<vmem>>, vector<1x1x8x128xf32>
    %371 = vector.shape_cast %370 : vector<1x1x8x128xf32> to vector<8x128xf32>
    %372 = arith.addf %357, %371 : vector<8x128xf32>
    %c0_173 = arith.constant 0 : index
    %c3_174 = arith.constant 3 : index
    %c0_175 = arith.constant 0 : index
    %c0_176 = arith.constant 0 : index
    %373 = vector.load %arg2[%c0_173, %c3_174, %c0_175, %c0_176] : memref<1x6x8x128xf32, #tpu.memory_space<vmem>>, vector<1x1x8x128xf32>
    %374 = vector.shape_cast %373 : vector<1x1x8x128xf32> to vector<8x128xf32>
    %375 = arith.addf %354, %374 : vector<8x128xf32>
    %c0_177 = arith.constant 0 : index
    %c4_178 = arith.constant 4 : index
    %c0_179 = arith.constant 0 : index
    %c0_180 = arith.constant 0 : index
    %376 = vector.load %arg2[%c0_177, %c4_178, %c0_179, %c0_180] : memref<1x6x8x128xf32, #tpu.memory_space<vmem>>, vector<1x1x8x128xf32>
    %377 = vector.shape_cast %376 : vector<1x1x8x128xf32> to vector<8x128xf32>
    %378 = arith.addf %360, %377 : vector<8x128xf32>
    %c0_181 = arith.constant 0 : index
    %c5_182 = arith.constant 5 : index
    %c0_183 = arith.constant 0 : index
    %c0_184 = arith.constant 0 : index
    %379 = vector.load %arg2[%c0_181, %c5_182, %c0_183, %c0_184] : memref<1x6x8x128xf32, #tpu.memory_space<vmem>>, vector<1x1x8x128xf32>
    %380 = vector.shape_cast %379 : vector<1x1x8x128xf32> to vector<8x128xf32>
    %381 = arith.addf %363, %380 : vector<8x128xf32>
    %382 = arith.subf %375, %366 : vector<8x128xf32>
    %cst_185 = arith.constant 0.000000e+00 : f32
    %383 = vector.broadcast %cst_185 : f32 to vector<8x128xf32>
    %384 = arith.cmpf oge, %382, %383 : vector<8x128xf32>
    %cst_186 = arith.constant 1.000000e+00 : f32
    %cst_187 = arith.constant -1.000000e+00 : f32
    %385 = vector.broadcast %cst_186 : f32 to vector<8x128xf32>
    %386 = vector.broadcast %cst_187 : f32 to vector<8x128xf32>
    %387 = arith.select %384, %385, %386 : vector<8x128xi1>, vector<8x128xf32>
    %388 = arith.addf %369, %369 : vector<8x128xf32>
    %389 = math.absf %382 : vector<8x128xf32>
    %390 = arith.mulf %382, %382 : vector<8x128xf32>
    %391 = arith.mulf %388, %388 : vector<8x128xf32>
    %392 = arith.addf %390, %391 : vector<8x128xf32>
    %393 = math.sqrt %392 : vector<8x128xf32>
    %394 = arith.addf %389, %393 : vector<8x128xf32>
    %cst_188 = arith.constant 9.99999991E-38 : f32
    %395 = vector.broadcast %cst_188 : f32 to vector<8x128xf32>
    %396 = arith.addf %394, %395 : vector<8x128xf32>
    %397 = tpu.reciprocal %396 {approx = true} : vector<8x128xf32> -> vector<8x128xf32>
    %398 = arith.mulf %396, %397 : vector<8x128xf32>
    %cst_189 = arith.constant 2.000000e+00 : f32
    %399 = vector.broadcast %cst_189 : f32 to vector<8x128xf32>
    %400 = arith.subf %399, %398 : vector<8x128xf32>
    %401 = arith.mulf %397, %400 : vector<8x128xf32>
    %402 = arith.mulf %388, %387 : vector<8x128xf32>
    %403 = arith.mulf %402, %401 : vector<8x128xf32>
    %404 = arith.mulf %403, %403 : vector<8x128xf32>
    %cst_190 = arith.constant 1.000000e+00 : f32
    %405 = vector.broadcast %cst_190 : f32 to vector<8x128xf32>
    %406 = arith.addf %404, %405 : vector<8x128xf32>
    %407 = math.rsqrt %406 : vector<8x128xf32>
    %408 = arith.mulf %403, %407 : vector<8x128xf32>
    %409 = arith.mulf %403, %369 : vector<8x128xf32>
    %410 = arith.subf %366, %409 : vector<8x128xf32>
    %411 = arith.addf %375, %409 : vector<8x128xf32>
    %412 = arith.mulf %407, %372 : vector<8x128xf32>
    %413 = arith.mulf %408, %378 : vector<8x128xf32>
    %414 = arith.subf %412, %413 : vector<8x128xf32>
    %415 = arith.mulf %408, %372 : vector<8x128xf32>
    %416 = arith.mulf %407, %378 : vector<8x128xf32>
    %417 = arith.addf %415, %416 : vector<8x128xf32>
    %418 = arith.mulf %407, %1 : vector<8x128xf32>
    %419 = arith.mulf %408, %0 : vector<8x128xf32>
    %420 = arith.subf %418, %419 : vector<8x128xf32>
    %421 = arith.mulf %408, %1 : vector<8x128xf32>
    %422 = arith.mulf %407, %0 : vector<8x128xf32>
    %423 = arith.addf %421, %422 : vector<8x128xf32>
    %424 = arith.mulf %407, %0 : vector<8x128xf32>
    %425 = arith.mulf %408, %1 : vector<8x128xf32>
    %426 = arith.subf %424, %425 : vector<8x128xf32>
    %427 = arith.mulf %408, %0 : vector<8x128xf32>
    %428 = arith.mulf %407, %1 : vector<8x128xf32>
    %429 = arith.addf %427, %428 : vector<8x128xf32>
    %430 = arith.mulf %407, %0 : vector<8x128xf32>
    %431 = arith.mulf %408, %0 : vector<8x128xf32>
    %432 = arith.subf %430, %431 : vector<8x128xf32>
    %433 = arith.mulf %408, %0 : vector<8x128xf32>
    %434 = arith.mulf %407, %0 : vector<8x128xf32>
    %435 = arith.addf %433, %434 : vector<8x128xf32>
    %436 = arith.subf %381, %410 : vector<8x128xf32>
    %cst_191 = arith.constant 0.000000e+00 : f32
    %437 = vector.broadcast %cst_191 : f32 to vector<8x128xf32>
    %438 = arith.cmpf oge, %436, %437 : vector<8x128xf32>
    %cst_192 = arith.constant 1.000000e+00 : f32
    %cst_193 = arith.constant -1.000000e+00 : f32
    %439 = vector.broadcast %cst_192 : f32 to vector<8x128xf32>
    %440 = vector.broadcast %cst_193 : f32 to vector<8x128xf32>
    %441 = arith.select %438, %439, %440 : vector<8x128xi1>, vector<8x128xf32>
    %442 = arith.addf %414, %414 : vector<8x128xf32>
    %443 = math.absf %436 : vector<8x128xf32>
    %444 = arith.mulf %436, %436 : vector<8x128xf32>
    %445 = arith.mulf %442, %442 : vector<8x128xf32>
    %446 = arith.addf %444, %445 : vector<8x128xf32>
    %447 = math.sqrt %446 : vector<8x128xf32>
    %448 = arith.addf %443, %447 : vector<8x128xf32>
    %cst_194 = arith.constant 9.99999991E-38 : f32
    %449 = vector.broadcast %cst_194 : f32 to vector<8x128xf32>
    %450 = arith.addf %448, %449 : vector<8x128xf32>
    %451 = tpu.reciprocal %450 {approx = true} : vector<8x128xf32> -> vector<8x128xf32>
    %452 = arith.mulf %450, %451 : vector<8x128xf32>
    %cst_195 = arith.constant 2.000000e+00 : f32
    %453 = vector.broadcast %cst_195 : f32 to vector<8x128xf32>
    %454 = arith.subf %453, %452 : vector<8x128xf32>
    %455 = arith.mulf %451, %454 : vector<8x128xf32>
    %456 = arith.mulf %442, %441 : vector<8x128xf32>
    %457 = arith.mulf %456, %455 : vector<8x128xf32>
    %458 = arith.mulf %457, %457 : vector<8x128xf32>
    %cst_196 = arith.constant 1.000000e+00 : f32
    %459 = vector.broadcast %cst_196 : f32 to vector<8x128xf32>
    %460 = arith.addf %458, %459 : vector<8x128xf32>
    %461 = math.rsqrt %460 : vector<8x128xf32>
    %462 = arith.mulf %457, %461 : vector<8x128xf32>
    %463 = arith.mulf %457, %414 : vector<8x128xf32>
    %464 = arith.subf %410, %463 : vector<8x128xf32>
    %465 = arith.addf %381, %463 : vector<8x128xf32>
    %466 = arith.mulf %461, %0 : vector<8x128xf32>
    %467 = arith.mulf %462, %417 : vector<8x128xf32>
    %468 = arith.subf %466, %467 : vector<8x128xf32>
    %469 = arith.mulf %462, %0 : vector<8x128xf32>
    %470 = arith.mulf %461, %417 : vector<8x128xf32>
    %471 = arith.addf %469, %470 : vector<8x128xf32>
    %472 = arith.mulf %461, %420 : vector<8x128xf32>
    %473 = arith.mulf %462, %0 : vector<8x128xf32>
    %474 = arith.subf %472, %473 : vector<8x128xf32>
    %475 = arith.mulf %462, %420 : vector<8x128xf32>
    %476 = arith.mulf %461, %0 : vector<8x128xf32>
    %477 = arith.addf %475, %476 : vector<8x128xf32>
    %478 = arith.mulf %461, %426 : vector<8x128xf32>
    %479 = arith.mulf %462, %0 : vector<8x128xf32>
    %480 = arith.subf %478, %479 : vector<8x128xf32>
    %481 = arith.mulf %462, %426 : vector<8x128xf32>
    %482 = arith.mulf %461, %0 : vector<8x128xf32>
    %483 = arith.addf %481, %482 : vector<8x128xf32>
    %484 = arith.mulf %461, %432 : vector<8x128xf32>
    %485 = arith.mulf %462, %1 : vector<8x128xf32>
    %486 = arith.subf %484, %485 : vector<8x128xf32>
    %487 = arith.mulf %462, %432 : vector<8x128xf32>
    %488 = arith.mulf %461, %1 : vector<8x128xf32>
    %489 = arith.addf %487, %488 : vector<8x128xf32>
    %490 = arith.subf %465, %411 : vector<8x128xf32>
    %cst_197 = arith.constant 0.000000e+00 : f32
    %491 = vector.broadcast %cst_197 : f32 to vector<8x128xf32>
    %492 = arith.cmpf oge, %490, %491 : vector<8x128xf32>
    %cst_198 = arith.constant 1.000000e+00 : f32
    %cst_199 = arith.constant -1.000000e+00 : f32
    %493 = vector.broadcast %cst_198 : f32 to vector<8x128xf32>
    %494 = vector.broadcast %cst_199 : f32 to vector<8x128xf32>
    %495 = arith.select %492, %493, %494 : vector<8x128xi1>, vector<8x128xf32>
    %496 = arith.addf %471, %471 : vector<8x128xf32>
    %497 = math.absf %490 : vector<8x128xf32>
    %498 = arith.mulf %490, %490 : vector<8x128xf32>
    %499 = arith.mulf %496, %496 : vector<8x128xf32>
    %500 = arith.addf %498, %499 : vector<8x128xf32>
    %501 = math.sqrt %500 : vector<8x128xf32>
    %502 = arith.addf %497, %501 : vector<8x128xf32>
    %cst_200 = arith.constant 9.99999991E-38 : f32
    %503 = vector.broadcast %cst_200 : f32 to vector<8x128xf32>
    %504 = arith.addf %502, %503 : vector<8x128xf32>
    %505 = tpu.reciprocal %504 {approx = true} : vector<8x128xf32> -> vector<8x128xf32>
    %506 = arith.mulf %504, %505 : vector<8x128xf32>
    %cst_201 = arith.constant 2.000000e+00 : f32
    %507 = vector.broadcast %cst_201 : f32 to vector<8x128xf32>
    %508 = arith.subf %507, %506 : vector<8x128xf32>
    %509 = arith.mulf %505, %508 : vector<8x128xf32>
    %510 = arith.mulf %496, %495 : vector<8x128xf32>
    %511 = arith.mulf %510, %509 : vector<8x128xf32>
    %512 = arith.mulf %511, %511 : vector<8x128xf32>
    %cst_202 = arith.constant 1.000000e+00 : f32
    %513 = vector.broadcast %cst_202 : f32 to vector<8x128xf32>
    %514 = arith.addf %512, %513 : vector<8x128xf32>
    %515 = math.rsqrt %514 : vector<8x128xf32>
    %516 = arith.mulf %511, %515 : vector<8x128xf32>
    %517 = arith.mulf %511, %471 : vector<8x128xf32>
    %518 = arith.subf %411, %517 : vector<8x128xf32>
    %519 = arith.addf %465, %517 : vector<8x128xf32>
    %520 = arith.mulf %515, %468 : vector<8x128xf32>
    %521 = arith.mulf %516, %0 : vector<8x128xf32>
    %522 = arith.subf %520, %521 : vector<8x128xf32>
    %523 = arith.mulf %516, %468 : vector<8x128xf32>
    %524 = arith.mulf %515, %0 : vector<8x128xf32>
    %525 = arith.addf %523, %524 : vector<8x128xf32>
    %526 = arith.mulf %515, %423 : vector<8x128xf32>
    %527 = arith.mulf %516, %477 : vector<8x128xf32>
    %528 = arith.subf %526, %527 : vector<8x128xf32>
    %529 = arith.mulf %516, %423 : vector<8x128xf32>
    %530 = arith.mulf %515, %477 : vector<8x128xf32>
    %531 = arith.addf %529, %530 : vector<8x128xf32>
    %532 = arith.mulf %515, %429 : vector<8x128xf32>
    %533 = arith.mulf %516, %483 : vector<8x128xf32>
    %534 = arith.subf %532, %533 : vector<8x128xf32>
    %535 = arith.mulf %516, %429 : vector<8x128xf32>
    %536 = arith.mulf %515, %483 : vector<8x128xf32>
    %537 = arith.addf %535, %536 : vector<8x128xf32>
    %538 = arith.mulf %515, %435 : vector<8x128xf32>
    %539 = arith.mulf %516, %489 : vector<8x128xf32>
    %540 = arith.subf %538, %539 : vector<8x128xf32>
    %541 = arith.mulf %516, %435 : vector<8x128xf32>
    %542 = arith.mulf %515, %489 : vector<8x128xf32>
    %543 = arith.addf %541, %542 : vector<8x128xf32>
    %544 = arith.subf %518, %464 : vector<8x128xf32>
    %cst_203 = arith.constant 0.000000e+00 : f32
    %545 = vector.broadcast %cst_203 : f32 to vector<8x128xf32>
    %546 = arith.cmpf oge, %544, %545 : vector<8x128xf32>
    %cst_204 = arith.constant 1.000000e+00 : f32
    %cst_205 = arith.constant -1.000000e+00 : f32
    %547 = vector.broadcast %cst_204 : f32 to vector<8x128xf32>
    %548 = vector.broadcast %cst_205 : f32 to vector<8x128xf32>
    %549 = arith.select %546, %547, %548 : vector<8x128xi1>, vector<8x128xf32>
    %550 = arith.addf %522, %522 : vector<8x128xf32>
    %551 = math.absf %544 : vector<8x128xf32>
    %552 = arith.mulf %544, %544 : vector<8x128xf32>
    %553 = arith.mulf %550, %550 : vector<8x128xf32>
    %554 = arith.addf %552, %553 : vector<8x128xf32>
    %555 = math.sqrt %554 : vector<8x128xf32>
    %556 = arith.addf %551, %555 : vector<8x128xf32>
    %cst_206 = arith.constant 9.99999991E-38 : f32
    %557 = vector.broadcast %cst_206 : f32 to vector<8x128xf32>
    %558 = arith.addf %556, %557 : vector<8x128xf32>
    %559 = tpu.reciprocal %558 {approx = true} : vector<8x128xf32> -> vector<8x128xf32>
    %560 = arith.mulf %558, %559 : vector<8x128xf32>
    %cst_207 = arith.constant 2.000000e+00 : f32
    %561 = vector.broadcast %cst_207 : f32 to vector<8x128xf32>
    %562 = arith.subf %561, %560 : vector<8x128xf32>
    %563 = arith.mulf %559, %562 : vector<8x128xf32>
    %564 = arith.mulf %550, %549 : vector<8x128xf32>
    %565 = arith.mulf %564, %563 : vector<8x128xf32>
    %566 = arith.mulf %565, %565 : vector<8x128xf32>
    %cst_208 = arith.constant 1.000000e+00 : f32
    %567 = vector.broadcast %cst_208 : f32 to vector<8x128xf32>
    %568 = arith.addf %566, %567 : vector<8x128xf32>
    %569 = math.rsqrt %568 : vector<8x128xf32>
    %570 = arith.mulf %565, %569 : vector<8x128xf32>
    %571 = arith.mulf %565, %522 : vector<8x128xf32>
    %572 = arith.subf %464, %571 : vector<8x128xf32>
    %573 = arith.addf %518, %571 : vector<8x128xf32>
    %574 = arith.mulf %569, %525 : vector<8x128xf32>
    %575 = arith.mulf %570, %0 : vector<8x128xf32>
    %576 = arith.subf %574, %575 : vector<8x128xf32>
    %577 = arith.mulf %570, %525 : vector<8x128xf32>
    %578 = arith.mulf %569, %0 : vector<8x128xf32>
    %579 = arith.addf %577, %578 : vector<8x128xf32>
    %580 = arith.mulf %569, %474 : vector<8x128xf32>
    %581 = arith.mulf %570, %528 : vector<8x128xf32>
    %582 = arith.subf %580, %581 : vector<8x128xf32>
    %583 = arith.mulf %570, %474 : vector<8x128xf32>
    %584 = arith.mulf %569, %528 : vector<8x128xf32>
    %585 = arith.addf %583, %584 : vector<8x128xf32>
    %586 = arith.mulf %569, %480 : vector<8x128xf32>
    %587 = arith.mulf %570, %534 : vector<8x128xf32>
    %588 = arith.subf %586, %587 : vector<8x128xf32>
    %589 = arith.mulf %570, %480 : vector<8x128xf32>
    %590 = arith.mulf %569, %534 : vector<8x128xf32>
    %591 = arith.addf %589, %590 : vector<8x128xf32>
    %592 = arith.mulf %569, %486 : vector<8x128xf32>
    %593 = arith.mulf %570, %540 : vector<8x128xf32>
    %594 = arith.subf %592, %593 : vector<8x128xf32>
    %595 = arith.mulf %570, %486 : vector<8x128xf32>
    %596 = arith.mulf %569, %540 : vector<8x128xf32>
    %597 = arith.addf %595, %596 : vector<8x128xf32>
    %598 = arith.subf %519, %572 : vector<8x128xf32>
    %cst_209 = arith.constant 0.000000e+00 : f32
    %599 = vector.broadcast %cst_209 : f32 to vector<8x128xf32>
    %600 = arith.cmpf oge, %598, %599 : vector<8x128xf32>
    %cst_210 = arith.constant 1.000000e+00 : f32
    %cst_211 = arith.constant -1.000000e+00 : f32
    %601 = vector.broadcast %cst_210 : f32 to vector<8x128xf32>
    %602 = vector.broadcast %cst_211 : f32 to vector<8x128xf32>
    %603 = arith.select %600, %601, %602 : vector<8x128xi1>, vector<8x128xf32>
    %604 = arith.addf %576, %576 : vector<8x128xf32>
    %605 = math.absf %598 : vector<8x128xf32>
    %606 = arith.mulf %598, %598 : vector<8x128xf32>
    %607 = arith.mulf %604, %604 : vector<8x128xf32>
    %608 = arith.addf %606, %607 : vector<8x128xf32>
    %609 = math.sqrt %608 : vector<8x128xf32>
    %610 = arith.addf %605, %609 : vector<8x128xf32>
    %cst_212 = arith.constant 9.99999991E-38 : f32
    %611 = vector.broadcast %cst_212 : f32 to vector<8x128xf32>
    %612 = arith.addf %610, %611 : vector<8x128xf32>
    %613 = tpu.reciprocal %612 {approx = true} : vector<8x128xf32> -> vector<8x128xf32>
    %614 = arith.mulf %612, %613 : vector<8x128xf32>
    %cst_213 = arith.constant 2.000000e+00 : f32
    %615 = vector.broadcast %cst_213 : f32 to vector<8x128xf32>
    %616 = arith.subf %615, %614 : vector<8x128xf32>
    %617 = arith.mulf %613, %616 : vector<8x128xf32>
    %618 = arith.mulf %604, %603 : vector<8x128xf32>
    %619 = arith.mulf %618, %617 : vector<8x128xf32>
    %620 = arith.mulf %619, %619 : vector<8x128xf32>
    %cst_214 = arith.constant 1.000000e+00 : f32
    %621 = vector.broadcast %cst_214 : f32 to vector<8x128xf32>
    %622 = arith.addf %620, %621 : vector<8x128xf32>
    %623 = math.rsqrt %622 : vector<8x128xf32>
    %624 = arith.mulf %619, %623 : vector<8x128xf32>
    %625 = arith.mulf %619, %576 : vector<8x128xf32>
    %626 = arith.subf %572, %625 : vector<8x128xf32>
    %627 = arith.addf %519, %625 : vector<8x128xf32>
    %628 = arith.mulf %623, %0 : vector<8x128xf32>
    %629 = arith.mulf %624, %579 : vector<8x128xf32>
    %630 = arith.subf %628, %629 : vector<8x128xf32>
    %631 = arith.mulf %624, %0 : vector<8x128xf32>
    %632 = arith.mulf %623, %579 : vector<8x128xf32>
    %633 = arith.addf %631, %632 : vector<8x128xf32>
    %634 = arith.mulf %623, %582 : vector<8x128xf32>
    %635 = arith.mulf %624, %531 : vector<8x128xf32>
    %636 = arith.subf %634, %635 : vector<8x128xf32>
    %637 = arith.mulf %624, %582 : vector<8x128xf32>
    %638 = arith.mulf %623, %531 : vector<8x128xf32>
    %639 = arith.addf %637, %638 : vector<8x128xf32>
    %640 = arith.mulf %623, %588 : vector<8x128xf32>
    %641 = arith.mulf %624, %537 : vector<8x128xf32>
    %642 = arith.subf %640, %641 : vector<8x128xf32>
    %643 = arith.mulf %624, %588 : vector<8x128xf32>
    %644 = arith.mulf %623, %537 : vector<8x128xf32>
    %645 = arith.addf %643, %644 : vector<8x128xf32>
    %646 = arith.mulf %623, %594 : vector<8x128xf32>
    %647 = arith.mulf %624, %543 : vector<8x128xf32>
    %648 = arith.subf %646, %647 : vector<8x128xf32>
    %649 = arith.mulf %624, %594 : vector<8x128xf32>
    %650 = arith.mulf %623, %543 : vector<8x128xf32>
    %651 = arith.addf %649, %650 : vector<8x128xf32>
    %652 = arith.subf %627, %573 : vector<8x128xf32>
    %cst_215 = arith.constant 0.000000e+00 : f32
    %653 = vector.broadcast %cst_215 : f32 to vector<8x128xf32>
    %654 = arith.cmpf oge, %652, %653 : vector<8x128xf32>
    %cst_216 = arith.constant 1.000000e+00 : f32
    %cst_217 = arith.constant -1.000000e+00 : f32
    %655 = vector.broadcast %cst_216 : f32 to vector<8x128xf32>
    %656 = vector.broadcast %cst_217 : f32 to vector<8x128xf32>
    %657 = arith.select %654, %655, %656 : vector<8x128xi1>, vector<8x128xf32>
    %658 = arith.addf %633, %633 : vector<8x128xf32>
    %659 = math.absf %652 : vector<8x128xf32>
    %660 = arith.mulf %652, %652 : vector<8x128xf32>
    %661 = arith.mulf %658, %658 : vector<8x128xf32>
    %662 = arith.addf %660, %661 : vector<8x128xf32>
    %663 = math.sqrt %662 : vector<8x128xf32>
    %664 = arith.addf %659, %663 : vector<8x128xf32>
    %cst_218 = arith.constant 9.99999991E-38 : f32
    %665 = vector.broadcast %cst_218 : f32 to vector<8x128xf32>
    %666 = arith.addf %664, %665 : vector<8x128xf32>
    %667 = tpu.reciprocal %666 {approx = true} : vector<8x128xf32> -> vector<8x128xf32>
    %668 = arith.mulf %666, %667 : vector<8x128xf32>
    %cst_219 = arith.constant 2.000000e+00 : f32
    %669 = vector.broadcast %cst_219 : f32 to vector<8x128xf32>
    %670 = arith.subf %669, %668 : vector<8x128xf32>
    %671 = arith.mulf %667, %670 : vector<8x128xf32>
    %672 = arith.mulf %658, %657 : vector<8x128xf32>
    %673 = arith.mulf %672, %671 : vector<8x128xf32>
    %674 = arith.mulf %673, %673 : vector<8x128xf32>
    %cst_220 = arith.constant 1.000000e+00 : f32
    %675 = vector.broadcast %cst_220 : f32 to vector<8x128xf32>
    %676 = arith.addf %674, %675 : vector<8x128xf32>
    %677 = math.rsqrt %676 : vector<8x128xf32>
    %678 = arith.mulf %673, %677 : vector<8x128xf32>
    %679 = arith.mulf %673, %633 : vector<8x128xf32>
    %680 = arith.subf %573, %679 : vector<8x128xf32>
    %681 = arith.addf %627, %679 : vector<8x128xf32>
    %682 = arith.mulf %677, %630 : vector<8x128xf32>
    %683 = arith.mulf %678, %0 : vector<8x128xf32>
    %684 = arith.subf %682, %683 : vector<8x128xf32>
    %685 = arith.mulf %678, %630 : vector<8x128xf32>
    %686 = arith.mulf %677, %0 : vector<8x128xf32>
    %687 = arith.addf %685, %686 : vector<8x128xf32>
    %688 = arith.mulf %677, %585 : vector<8x128xf32>
    %689 = arith.mulf %678, %639 : vector<8x128xf32>
    %690 = arith.subf %688, %689 : vector<8x128xf32>
    %691 = arith.mulf %678, %585 : vector<8x128xf32>
    %692 = arith.mulf %677, %639 : vector<8x128xf32>
    %693 = arith.addf %691, %692 : vector<8x128xf32>
    %694 = arith.mulf %677, %591 : vector<8x128xf32>
    %695 = arith.mulf %678, %645 : vector<8x128xf32>
    %696 = arith.subf %694, %695 : vector<8x128xf32>
    %697 = arith.mulf %678, %591 : vector<8x128xf32>
    %698 = arith.mulf %677, %645 : vector<8x128xf32>
    %699 = arith.addf %697, %698 : vector<8x128xf32>
    %700 = arith.mulf %677, %597 : vector<8x128xf32>
    %701 = arith.mulf %678, %651 : vector<8x128xf32>
    %702 = arith.subf %700, %701 : vector<8x128xf32>
    %703 = arith.mulf %678, %597 : vector<8x128xf32>
    %704 = arith.mulf %677, %651 : vector<8x128xf32>
    %705 = arith.addf %703, %704 : vector<8x128xf32>
    %706 = arith.subf %680, %626 : vector<8x128xf32>
    %cst_221 = arith.constant 0.000000e+00 : f32
    %707 = vector.broadcast %cst_221 : f32 to vector<8x128xf32>
    %708 = arith.cmpf oge, %706, %707 : vector<8x128xf32>
    %cst_222 = arith.constant 1.000000e+00 : f32
    %cst_223 = arith.constant -1.000000e+00 : f32
    %709 = vector.broadcast %cst_222 : f32 to vector<8x128xf32>
    %710 = vector.broadcast %cst_223 : f32 to vector<8x128xf32>
    %711 = arith.select %708, %709, %710 : vector<8x128xi1>, vector<8x128xf32>
    %712 = arith.addf %684, %684 : vector<8x128xf32>
    %713 = math.absf %706 : vector<8x128xf32>
    %714 = arith.mulf %706, %706 : vector<8x128xf32>
    %715 = arith.mulf %712, %712 : vector<8x128xf32>
    %716 = arith.addf %714, %715 : vector<8x128xf32>
    %717 = math.sqrt %716 : vector<8x128xf32>
    %718 = arith.addf %713, %717 : vector<8x128xf32>
    %cst_224 = arith.constant 9.99999991E-38 : f32
    %719 = vector.broadcast %cst_224 : f32 to vector<8x128xf32>
    %720 = arith.addf %718, %719 : vector<8x128xf32>
    %721 = tpu.reciprocal %720 {approx = true} : vector<8x128xf32> -> vector<8x128xf32>
    %722 = arith.mulf %720, %721 : vector<8x128xf32>
    %cst_225 = arith.constant 2.000000e+00 : f32
    %723 = vector.broadcast %cst_225 : f32 to vector<8x128xf32>
    %724 = arith.subf %723, %722 : vector<8x128xf32>
    %725 = arith.mulf %721, %724 : vector<8x128xf32>
    %726 = arith.mulf %712, %711 : vector<8x128xf32>
    %727 = arith.mulf %726, %725 : vector<8x128xf32>
    %728 = arith.mulf %727, %727 : vector<8x128xf32>
    %cst_226 = arith.constant 1.000000e+00 : f32
    %729 = vector.broadcast %cst_226 : f32 to vector<8x128xf32>
    %730 = arith.addf %728, %729 : vector<8x128xf32>
    %731 = math.rsqrt %730 : vector<8x128xf32>
    %732 = arith.mulf %727, %731 : vector<8x128xf32>
    %733 = arith.mulf %727, %684 : vector<8x128xf32>
    %734 = arith.subf %626, %733 : vector<8x128xf32>
    %735 = arith.addf %680, %733 : vector<8x128xf32>
    %736 = arith.mulf %731, %687 : vector<8x128xf32>
    %737 = arith.mulf %732, %0 : vector<8x128xf32>
    %738 = arith.subf %736, %737 : vector<8x128xf32>
    %739 = arith.mulf %732, %687 : vector<8x128xf32>
    %740 = arith.mulf %731, %0 : vector<8x128xf32>
    %741 = arith.addf %739, %740 : vector<8x128xf32>
    %742 = arith.mulf %731, %636 : vector<8x128xf32>
    %743 = arith.mulf %732, %690 : vector<8x128xf32>
    %744 = arith.subf %742, %743 : vector<8x128xf32>
    %745 = arith.mulf %732, %636 : vector<8x128xf32>
    %746 = arith.mulf %731, %690 : vector<8x128xf32>
    %747 = arith.addf %745, %746 : vector<8x128xf32>
    %748 = arith.mulf %731, %642 : vector<8x128xf32>
    %749 = arith.mulf %732, %696 : vector<8x128xf32>
    %750 = arith.subf %748, %749 : vector<8x128xf32>
    %751 = arith.mulf %732, %642 : vector<8x128xf32>
    %752 = arith.mulf %731, %696 : vector<8x128xf32>
    %753 = arith.addf %751, %752 : vector<8x128xf32>
    %754 = arith.mulf %731, %648 : vector<8x128xf32>
    %755 = arith.mulf %732, %702 : vector<8x128xf32>
    %756 = arith.subf %754, %755 : vector<8x128xf32>
    %757 = arith.mulf %732, %648 : vector<8x128xf32>
    %758 = arith.mulf %731, %702 : vector<8x128xf32>
    %759 = arith.addf %757, %758 : vector<8x128xf32>
    %760 = arith.subf %681, %734 : vector<8x128xf32>
    %cst_227 = arith.constant 0.000000e+00 : f32
    %761 = vector.broadcast %cst_227 : f32 to vector<8x128xf32>
    %762 = arith.cmpf oge, %760, %761 : vector<8x128xf32>
    %cst_228 = arith.constant 1.000000e+00 : f32
    %cst_229 = arith.constant -1.000000e+00 : f32
    %763 = vector.broadcast %cst_228 : f32 to vector<8x128xf32>
    %764 = vector.broadcast %cst_229 : f32 to vector<8x128xf32>
    %765 = arith.select %762, %763, %764 : vector<8x128xi1>, vector<8x128xf32>
    %766 = arith.addf %738, %738 : vector<8x128xf32>
    %767 = math.absf %760 : vector<8x128xf32>
    %768 = arith.mulf %760, %760 : vector<8x128xf32>
    %769 = arith.mulf %766, %766 : vector<8x128xf32>
    %770 = arith.addf %768, %769 : vector<8x128xf32>
    %771 = math.sqrt %770 : vector<8x128xf32>
    %772 = arith.addf %767, %771 : vector<8x128xf32>
    %cst_230 = arith.constant 9.99999991E-38 : f32
    %773 = vector.broadcast %cst_230 : f32 to vector<8x128xf32>
    %774 = arith.addf %772, %773 : vector<8x128xf32>
    %775 = tpu.reciprocal %774 {approx = true} : vector<8x128xf32> -> vector<8x128xf32>
    %776 = arith.mulf %774, %775 : vector<8x128xf32>
    %cst_231 = arith.constant 2.000000e+00 : f32
    %777 = vector.broadcast %cst_231 : f32 to vector<8x128xf32>
    %778 = arith.subf %777, %776 : vector<8x128xf32>
    %779 = arith.mulf %775, %778 : vector<8x128xf32>
    %780 = arith.mulf %766, %765 : vector<8x128xf32>
    %781 = arith.mulf %780, %779 : vector<8x128xf32>
    %782 = arith.mulf %781, %781 : vector<8x128xf32>
    %cst_232 = arith.constant 1.000000e+00 : f32
    %783 = vector.broadcast %cst_232 : f32 to vector<8x128xf32>
    %784 = arith.addf %782, %783 : vector<8x128xf32>
    %785 = math.rsqrt %784 : vector<8x128xf32>
    %786 = arith.mulf %781, %785 : vector<8x128xf32>
    %787 = arith.mulf %781, %738 : vector<8x128xf32>
    %788 = arith.subf %734, %787 : vector<8x128xf32>
    %789 = arith.addf %681, %787 : vector<8x128xf32>
    %790 = arith.mulf %785, %0 : vector<8x128xf32>
    %791 = arith.mulf %786, %741 : vector<8x128xf32>
    %792 = arith.subf %790, %791 : vector<8x128xf32>
    %793 = arith.mulf %786, %0 : vector<8x128xf32>
    %794 = arith.mulf %785, %741 : vector<8x128xf32>
    %795 = arith.addf %793, %794 : vector<8x128xf32>
    %796 = arith.mulf %785, %744 : vector<8x128xf32>
    %797 = arith.mulf %786, %693 : vector<8x128xf32>
    %798 = arith.subf %796, %797 : vector<8x128xf32>
    %799 = arith.mulf %786, %744 : vector<8x128xf32>
    %800 = arith.mulf %785, %693 : vector<8x128xf32>
    %801 = arith.addf %799, %800 : vector<8x128xf32>
    %802 = arith.mulf %785, %750 : vector<8x128xf32>
    %803 = arith.mulf %786, %699 : vector<8x128xf32>
    %804 = arith.subf %802, %803 : vector<8x128xf32>
    %805 = arith.mulf %786, %750 : vector<8x128xf32>
    %806 = arith.mulf %785, %699 : vector<8x128xf32>
    %807 = arith.addf %805, %806 : vector<8x128xf32>
    %808 = arith.mulf %785, %756 : vector<8x128xf32>
    %809 = arith.mulf %786, %705 : vector<8x128xf32>
    %810 = arith.subf %808, %809 : vector<8x128xf32>
    %811 = arith.mulf %786, %756 : vector<8x128xf32>
    %812 = arith.mulf %785, %705 : vector<8x128xf32>
    %813 = arith.addf %811, %812 : vector<8x128xf32>
    %814 = arith.subf %789, %735 : vector<8x128xf32>
    %cst_233 = arith.constant 0.000000e+00 : f32
    %815 = vector.broadcast %cst_233 : f32 to vector<8x128xf32>
    %816 = arith.cmpf oge, %814, %815 : vector<8x128xf32>
    %cst_234 = arith.constant 1.000000e+00 : f32
    %cst_235 = arith.constant -1.000000e+00 : f32
    %817 = vector.broadcast %cst_234 : f32 to vector<8x128xf32>
    %818 = vector.broadcast %cst_235 : f32 to vector<8x128xf32>
    %819 = arith.select %816, %817, %818 : vector<8x128xi1>, vector<8x128xf32>
    %820 = arith.addf %795, %795 : vector<8x128xf32>
    %821 = math.absf %814 : vector<8x128xf32>
    %822 = arith.mulf %814, %814 : vector<8x128xf32>
    %823 = arith.mulf %820, %820 : vector<8x128xf32>
    %824 = arith.addf %822, %823 : vector<8x128xf32>
    %825 = math.sqrt %824 : vector<8x128xf32>
    %826 = arith.addf %821, %825 : vector<8x128xf32>
    %cst_236 = arith.constant 9.99999991E-38 : f32
    %827 = vector.broadcast %cst_236 : f32 to vector<8x128xf32>
    %828 = arith.addf %826, %827 : vector<8x128xf32>
    %829 = tpu.reciprocal %828 {approx = true} : vector<8x128xf32> -> vector<8x128xf32>
    %830 = arith.mulf %828, %829 : vector<8x128xf32>
    %cst_237 = arith.constant 2.000000e+00 : f32
    %831 = vector.broadcast %cst_237 : f32 to vector<8x128xf32>
    %832 = arith.subf %831, %830 : vector<8x128xf32>
    %833 = arith.mulf %829, %832 : vector<8x128xf32>
    %834 = arith.mulf %820, %819 : vector<8x128xf32>
    %835 = arith.mulf %834, %833 : vector<8x128xf32>
    %836 = arith.mulf %835, %835 : vector<8x128xf32>
    %cst_238 = arith.constant 1.000000e+00 : f32
    %837 = vector.broadcast %cst_238 : f32 to vector<8x128xf32>
    %838 = arith.addf %836, %837 : vector<8x128xf32>
    %839 = math.rsqrt %838 : vector<8x128xf32>
    %840 = arith.mulf %835, %839 : vector<8x128xf32>
    %841 = arith.mulf %835, %795 : vector<8x128xf32>
    %842 = arith.subf %735, %841 : vector<8x128xf32>
    %843 = arith.addf %789, %841 : vector<8x128xf32>
    %844 = arith.mulf %839, %792 : vector<8x128xf32>
    %845 = arith.mulf %840, %0 : vector<8x128xf32>
    %846 = arith.subf %844, %845 : vector<8x128xf32>
    %847 = arith.mulf %840, %792 : vector<8x128xf32>
    %848 = arith.mulf %839, %0 : vector<8x128xf32>
    %849 = arith.addf %847, %848 : vector<8x128xf32>
    %850 = arith.mulf %839, %747 : vector<8x128xf32>
    %851 = arith.mulf %840, %801 : vector<8x128xf32>
    %852 = arith.subf %850, %851 : vector<8x128xf32>
    %853 = arith.mulf %840, %747 : vector<8x128xf32>
    %854 = arith.mulf %839, %801 : vector<8x128xf32>
    %855 = arith.addf %853, %854 : vector<8x128xf32>
    %856 = arith.mulf %839, %753 : vector<8x128xf32>
    %857 = arith.mulf %840, %807 : vector<8x128xf32>
    %858 = arith.subf %856, %857 : vector<8x128xf32>
    %859 = arith.mulf %840, %753 : vector<8x128xf32>
    %860 = arith.mulf %839, %807 : vector<8x128xf32>
    %861 = arith.addf %859, %860 : vector<8x128xf32>
    %862 = arith.mulf %839, %759 : vector<8x128xf32>
    %863 = arith.mulf %840, %813 : vector<8x128xf32>
    %864 = arith.subf %862, %863 : vector<8x128xf32>
    %865 = arith.mulf %840, %759 : vector<8x128xf32>
    %866 = arith.mulf %839, %813 : vector<8x128xf32>
    %867 = arith.addf %865, %866 : vector<8x128xf32>
    %868 = arith.subf %842, %788 : vector<8x128xf32>
    %cst_239 = arith.constant 0.000000e+00 : f32
    %869 = vector.broadcast %cst_239 : f32 to vector<8x128xf32>
    %870 = arith.cmpf oge, %868, %869 : vector<8x128xf32>
    %cst_240 = arith.constant 1.000000e+00 : f32
    %cst_241 = arith.constant -1.000000e+00 : f32
    %871 = vector.broadcast %cst_240 : f32 to vector<8x128xf32>
    %872 = vector.broadcast %cst_241 : f32 to vector<8x128xf32>
    %873 = arith.select %870, %871, %872 : vector<8x128xi1>, vector<8x128xf32>
    %874 = arith.addf %846, %846 : vector<8x128xf32>
    %875 = math.absf %868 : vector<8x128xf32>
    %876 = arith.mulf %868, %868 : vector<8x128xf32>
    %877 = arith.mulf %874, %874 : vector<8x128xf32>
    %878 = arith.addf %876, %877 : vector<8x128xf32>
    %879 = math.sqrt %878 : vector<8x128xf32>
    %880 = arith.addf %875, %879 : vector<8x128xf32>
    %cst_242 = arith.constant 9.99999991E-38 : f32
    %881 = vector.broadcast %cst_242 : f32 to vector<8x128xf32>
    %882 = arith.addf %880, %881 : vector<8x128xf32>
    %883 = tpu.reciprocal %882 {approx = true} : vector<8x128xf32> -> vector<8x128xf32>
    %884 = arith.mulf %882, %883 : vector<8x128xf32>
    %cst_243 = arith.constant 2.000000e+00 : f32
    %885 = vector.broadcast %cst_243 : f32 to vector<8x128xf32>
    %886 = arith.subf %885, %884 : vector<8x128xf32>
    %887 = arith.mulf %883, %886 : vector<8x128xf32>
    %888 = arith.mulf %874, %873 : vector<8x128xf32>
    %889 = arith.mulf %888, %887 : vector<8x128xf32>
    %890 = arith.mulf %889, %889 : vector<8x128xf32>
    %cst_244 = arith.constant 1.000000e+00 : f32
    %891 = vector.broadcast %cst_244 : f32 to vector<8x128xf32>
    %892 = arith.addf %890, %891 : vector<8x128xf32>
    %893 = math.rsqrt %892 : vector<8x128xf32>
    %894 = arith.mulf %889, %893 : vector<8x128xf32>
    %895 = arith.mulf %889, %846 : vector<8x128xf32>
    %896 = arith.subf %788, %895 : vector<8x128xf32>
    %897 = arith.addf %842, %895 : vector<8x128xf32>
    %898 = arith.mulf %893, %849 : vector<8x128xf32>
    %899 = arith.mulf %894, %0 : vector<8x128xf32>
    %900 = arith.subf %898, %899 : vector<8x128xf32>
    %901 = arith.mulf %894, %849 : vector<8x128xf32>
    %902 = arith.mulf %893, %0 : vector<8x128xf32>
    %903 = arith.addf %901, %902 : vector<8x128xf32>
    %904 = arith.mulf %893, %798 : vector<8x128xf32>
    %905 = arith.mulf %894, %852 : vector<8x128xf32>
    %906 = arith.subf %904, %905 : vector<8x128xf32>
    %907 = arith.mulf %894, %798 : vector<8x128xf32>
    %908 = arith.mulf %893, %852 : vector<8x128xf32>
    %909 = arith.addf %907, %908 : vector<8x128xf32>
    %910 = arith.mulf %893, %804 : vector<8x128xf32>
    %911 = arith.mulf %894, %858 : vector<8x128xf32>
    %912 = arith.subf %910, %911 : vector<8x128xf32>
    %913 = arith.mulf %894, %804 : vector<8x128xf32>
    %914 = arith.mulf %893, %858 : vector<8x128xf32>
    %915 = arith.addf %913, %914 : vector<8x128xf32>
    %916 = arith.mulf %893, %810 : vector<8x128xf32>
    %917 = arith.mulf %894, %864 : vector<8x128xf32>
    %918 = arith.subf %916, %917 : vector<8x128xf32>
    %919 = arith.mulf %894, %810 : vector<8x128xf32>
    %920 = arith.mulf %893, %864 : vector<8x128xf32>
    %921 = arith.addf %919, %920 : vector<8x128xf32>
    %922 = arith.subf %843, %896 : vector<8x128xf32>
    %cst_245 = arith.constant 0.000000e+00 : f32
    %923 = vector.broadcast %cst_245 : f32 to vector<8x128xf32>
    %924 = arith.cmpf oge, %922, %923 : vector<8x128xf32>
    %cst_246 = arith.constant 1.000000e+00 : f32
    %cst_247 = arith.constant -1.000000e+00 : f32
    %925 = vector.broadcast %cst_246 : f32 to vector<8x128xf32>
    %926 = vector.broadcast %cst_247 : f32 to vector<8x128xf32>
    %927 = arith.select %924, %925, %926 : vector<8x128xi1>, vector<8x128xf32>
    %928 = arith.addf %900, %900 : vector<8x128xf32>
    %929 = math.absf %922 : vector<8x128xf32>
    %930 = arith.mulf %922, %922 : vector<8x128xf32>
    %931 = arith.mulf %928, %928 : vector<8x128xf32>
    %932 = arith.addf %930, %931 : vector<8x128xf32>
    %933 = math.sqrt %932 : vector<8x128xf32>
    %934 = arith.addf %929, %933 : vector<8x128xf32>
    %cst_248 = arith.constant 9.99999991E-38 : f32
    %935 = vector.broadcast %cst_248 : f32 to vector<8x128xf32>
    %936 = arith.addf %934, %935 : vector<8x128xf32>
    %937 = tpu.reciprocal %936 {approx = true} : vector<8x128xf32> -> vector<8x128xf32>
    %938 = arith.mulf %936, %937 : vector<8x128xf32>
    %cst_249 = arith.constant 2.000000e+00 : f32
    %939 = vector.broadcast %cst_249 : f32 to vector<8x128xf32>
    %940 = arith.subf %939, %938 : vector<8x128xf32>
    %941 = arith.mulf %937, %940 : vector<8x128xf32>
    %942 = arith.mulf %928, %927 : vector<8x128xf32>
    %943 = arith.mulf %942, %941 : vector<8x128xf32>
    %944 = arith.mulf %943, %943 : vector<8x128xf32>
    %cst_250 = arith.constant 1.000000e+00 : f32
    %945 = vector.broadcast %cst_250 : f32 to vector<8x128xf32>
    %946 = arith.addf %944, %945 : vector<8x128xf32>
    %947 = math.rsqrt %946 : vector<8x128xf32>
    %948 = arith.mulf %943, %947 : vector<8x128xf32>
    %949 = arith.mulf %943, %900 : vector<8x128xf32>
    %950 = arith.subf %896, %949 : vector<8x128xf32>
    %951 = arith.addf %843, %949 : vector<8x128xf32>
    %952 = arith.mulf %948, %0 : vector<8x128xf32>
    %953 = arith.mulf %947, %903 : vector<8x128xf32>
    %954 = arith.addf %952, %953 : vector<8x128xf32>
    %955 = arith.mulf %947, %906 : vector<8x128xf32>
    %956 = arith.mulf %948, %855 : vector<8x128xf32>
    %957 = arith.subf %955, %956 : vector<8x128xf32>
    %958 = arith.mulf %948, %906 : vector<8x128xf32>
    %959 = arith.mulf %947, %855 : vector<8x128xf32>
    %960 = arith.addf %958, %959 : vector<8x128xf32>
    %961 = arith.mulf %947, %912 : vector<8x128xf32>
    %962 = arith.mulf %948, %861 : vector<8x128xf32>
    %963 = arith.subf %961, %962 : vector<8x128xf32>
    %964 = arith.mulf %948, %912 : vector<8x128xf32>
    %965 = arith.mulf %947, %861 : vector<8x128xf32>
    %966 = arith.addf %964, %965 : vector<8x128xf32>
    %967 = arith.mulf %947, %918 : vector<8x128xf32>
    %968 = arith.mulf %948, %867 : vector<8x128xf32>
    %969 = arith.subf %967, %968 : vector<8x128xf32>
    %970 = arith.mulf %948, %918 : vector<8x128xf32>
    %971 = arith.mulf %947, %867 : vector<8x128xf32>
    %972 = arith.addf %970, %971 : vector<8x128xf32>
    %973 = arith.subf %951, %897 : vector<8x128xf32>
    %cst_251 = arith.constant 0.000000e+00 : f32
    %974 = vector.broadcast %cst_251 : f32 to vector<8x128xf32>
    %975 = arith.cmpf oge, %973, %974 : vector<8x128xf32>
    %cst_252 = arith.constant 1.000000e+00 : f32
    %cst_253 = arith.constant -1.000000e+00 : f32
    %976 = vector.broadcast %cst_252 : f32 to vector<8x128xf32>
    %977 = vector.broadcast %cst_253 : f32 to vector<8x128xf32>
    %978 = arith.select %975, %976, %977 : vector<8x128xi1>, vector<8x128xf32>
    %979 = arith.addf %954, %954 : vector<8x128xf32>
    %980 = math.absf %973 : vector<8x128xf32>
    %981 = arith.mulf %973, %973 : vector<8x128xf32>
    %982 = arith.mulf %979, %979 : vector<8x128xf32>
    %983 = arith.addf %981, %982 : vector<8x128xf32>
    %984 = math.sqrt %983 : vector<8x128xf32>
    %985 = arith.addf %980, %984 : vector<8x128xf32>
    %cst_254 = arith.constant 9.99999991E-38 : f32
    %986 = vector.broadcast %cst_254 : f32 to vector<8x128xf32>
    %987 = arith.addf %985, %986 : vector<8x128xf32>
    %988 = tpu.reciprocal %987 {approx = true} : vector<8x128xf32> -> vector<8x128xf32>
    %989 = arith.mulf %987, %988 : vector<8x128xf32>
    %cst_255 = arith.constant 2.000000e+00 : f32
    %990 = vector.broadcast %cst_255 : f32 to vector<8x128xf32>
    %991 = arith.subf %990, %989 : vector<8x128xf32>
    %992 = arith.mulf %988, %991 : vector<8x128xf32>
    %993 = arith.mulf %979, %978 : vector<8x128xf32>
    %994 = arith.mulf %993, %992 : vector<8x128xf32>
    %995 = arith.mulf %994, %994 : vector<8x128xf32>
    %cst_256 = arith.constant 1.000000e+00 : f32
    %996 = vector.broadcast %cst_256 : f32 to vector<8x128xf32>
    %997 = arith.addf %995, %996 : vector<8x128xf32>
    %998 = math.rsqrt %997 : vector<8x128xf32>
    %999 = arith.mulf %994, %998 : vector<8x128xf32>
    %1000 = arith.mulf %994, %954 : vector<8x128xf32>
    %1001 = arith.subf %897, %1000 : vector<8x128xf32>
    %1002 = arith.addf %951, %1000 : vector<8x128xf32>
    %1003 = arith.mulf %998, %909 : vector<8x128xf32>
    %1004 = arith.mulf %999, %960 : vector<8x128xf32>
    %1005 = arith.subf %1003, %1004 : vector<8x128xf32>
    %1006 = arith.mulf %999, %909 : vector<8x128xf32>
    %1007 = arith.mulf %998, %960 : vector<8x128xf32>
    %1008 = arith.addf %1006, %1007 : vector<8x128xf32>
    %1009 = arith.mulf %998, %915 : vector<8x128xf32>
    %1010 = arith.mulf %999, %966 : vector<8x128xf32>
    %1011 = arith.subf %1009, %1010 : vector<8x128xf32>
    %1012 = arith.mulf %999, %915 : vector<8x128xf32>
    %1013 = arith.mulf %998, %966 : vector<8x128xf32>
    %1014 = arith.addf %1012, %1013 : vector<8x128xf32>
    %1015 = arith.mulf %998, %921 : vector<8x128xf32>
    %1016 = arith.mulf %999, %972 : vector<8x128xf32>
    %1017 = arith.subf %1015, %1016 : vector<8x128xf32>
    %1018 = arith.mulf %999, %921 : vector<8x128xf32>
    %1019 = arith.mulf %998, %972 : vector<8x128xf32>
    %1020 = arith.addf %1018, %1019 : vector<8x128xf32>
    %1021 = arith.cmpf olt, %950, %1001 : vector<8x128xf32>
    %1022 = arith.select %1021, %1001, %950 : vector<8x128xi1>, vector<8x128xf32>
    %1023 = arith.select %1021, %950, %1001 : vector<8x128xi1>, vector<8x128xf32>
    %1024 = arith.select %1021, %1005, %957 : vector<8x128xi1>, vector<8x128xf32>
    %1025 = arith.select %1021, %957, %1005 : vector<8x128xi1>, vector<8x128xf32>
    %1026 = arith.select %1021, %1011, %963 : vector<8x128xi1>, vector<8x128xf32>
    %1027 = arith.select %1021, %963, %1011 : vector<8x128xi1>, vector<8x128xf32>
    %1028 = arith.select %1021, %1017, %969 : vector<8x128xi1>, vector<8x128xf32>
    %1029 = arith.select %1021, %969, %1017 : vector<8x128xi1>, vector<8x128xf32>
    %1030 = arith.cmpf olt, %1022, %1002 : vector<8x128xf32>
    %1031 = arith.select %1030, %1002, %1022 : vector<8x128xi1>, vector<8x128xf32>
    %1032 = arith.select %1030, %1022, %1002 : vector<8x128xi1>, vector<8x128xf32>
    %1033 = arith.select %1030, %1008, %1024 : vector<8x128xi1>, vector<8x128xf32>
    %1034 = arith.select %1030, %1024, %1008 : vector<8x128xi1>, vector<8x128xf32>
    %1035 = arith.select %1030, %1014, %1026 : vector<8x128xi1>, vector<8x128xf32>
    %1036 = arith.select %1030, %1026, %1014 : vector<8x128xi1>, vector<8x128xf32>
    %1037 = arith.select %1030, %1020, %1028 : vector<8x128xi1>, vector<8x128xf32>
    %1038 = arith.select %1030, %1028, %1020 : vector<8x128xi1>, vector<8x128xf32>
    %1039 = arith.cmpf olt, %1023, %1032 : vector<8x128xf32>
    %1040 = arith.select %1039, %1032, %1023 : vector<8x128xi1>, vector<8x128xf32>
    %1041 = arith.select %1039, %1023, %1032 : vector<8x128xi1>, vector<8x128xf32>
    %1042 = arith.select %1039, %1034, %1025 : vector<8x128xi1>, vector<8x128xf32>
    %1043 = arith.select %1039, %1025, %1034 : vector<8x128xi1>, vector<8x128xf32>
    %1044 = arith.select %1039, %1036, %1027 : vector<8x128xi1>, vector<8x128xf32>
    %1045 = arith.select %1039, %1027, %1036 : vector<8x128xi1>, vector<8x128xf32>
    %1046 = arith.select %1039, %1038, %1029 : vector<8x128xi1>, vector<8x128xf32>
    %1047 = arith.select %1039, %1029, %1038 : vector<8x128xi1>, vector<8x128xf32>
    %cst_257 = arith.constant 1.01353226E-9 : f32
    %1048 = vector.broadcast %cst_257 : f32 to vector<8x128xf32>
    %1049 = arith.maximumf %1031, %1048 : vector<8x128xf32>
    %1050 = arith.cmpf one, %1049, %1049 : vector<8x128xf32>
    %cst_258 = arith.constant 0.000000e+00 : f32
    %1051 = vector.broadcast %cst_258 : f32 to vector<8x128xf32>
    %1052 = arith.select %1050, %1051, %1049 : vector<8x128xi1>, vector<8x128xf32>
    %c0_259 = arith.constant 0 : index
    %c0_260 = arith.constant 0 : index
    %c0_261 = arith.constant 0 : index
    %c0_262 = arith.constant 0 : index
    %1053 = vector.load %arg3[%c0_259, %c0_260, %c0_261, %c0_262] : memref<1x3x8x128xf32, #tpu.memory_space<vmem>>, vector<1x1x8x128xf32>
    %1054 = vector.shape_cast %1053 : vector<1x1x8x128xf32> to vector<8x128xf32>
    %1055 = vector.shape_cast %1052 : vector<8x128xf32> to vector<1x1x8x128xf32>
    tpu.vector_store %arg3[%c0_259, %c0_260, %c0_261, %c0_262], %1055 {strides = array<i32>} : memref<1x3x8x128xf32, #tpu.memory_space<vmem>>, vector<1x1x8x128xf32>,
    %cst_263 = arith.constant 1.01353226E-9 : f32
    %1056 = vector.broadcast %cst_263 : f32 to vector<8x128xf32>
    %1057 = arith.maximumf %1040, %1056 : vector<8x128xf32>
    %1058 = arith.cmpf one, %1057, %1057 : vector<8x128xf32>
    %cst_264 = arith.constant 0.000000e+00 : f32
    %1059 = vector.broadcast %cst_264 : f32 to vector<8x128xf32>
    %1060 = arith.select %1058, %1059, %1057 : vector<8x128xi1>, vector<8x128xf32>
    %c0_265 = arith.constant 0 : index
    %c1_266 = arith.constant 1 : index
    %c0_267 = arith.constant 0 : index
    %c0_268 = arith.constant 0 : index
    %1061 = vector.load %arg3[%c0_265, %c1_266, %c0_267, %c0_268] : memref<1x3x8x128xf32, #tpu.memory_space<vmem>>, vector<1x1x8x128xf32>
    %1062 = vector.shape_cast %1061 : vector<1x1x8x128xf32> to vector<8x128xf32>
    %1063 = vector.shape_cast %1060 : vector<8x128xf32> to vector<1x1x8x128xf32>
    tpu.vector_store %arg3[%c0_265, %c1_266, %c0_267, %c0_268], %1063 {strides = array<i32>} : memref<1x3x8x128xf32, #tpu.memory_space<vmem>>, vector<1x1x8x128xf32>,
    %cst_269 = arith.constant 1.01353226E-9 : f32
    %1064 = vector.broadcast %cst_269 : f32 to vector<8x128xf32>
    %1065 = arith.maximumf %1041, %1064 : vector<8x128xf32>
    %1066 = arith.cmpf one, %1065, %1065 : vector<8x128xf32>
    %cst_270 = arith.constant 0.000000e+00 : f32
    %1067 = vector.broadcast %cst_270 : f32 to vector<8x128xf32>
    %1068 = arith.select %1066, %1067, %1065 : vector<8x128xi1>, vector<8x128xf32>
    %c0_271 = arith.constant 0 : index
    %c2_272 = arith.constant 2 : index
    %c0_273 = arith.constant 0 : index
    %c0_274 = arith.constant 0 : index
    %1069 = vector.load %arg3[%c0_271, %c2_272, %c0_273, %c0_274] : memref<1x3x8x128xf32, #tpu.memory_space<vmem>>, vector<1x1x8x128xf32>
    %1070 = vector.shape_cast %1069 : vector<1x1x8x128xf32> to vector<8x128xf32>
    %1071 = vector.shape_cast %1068 : vector<8x128xf32> to vector<1x1x8x128xf32>
    tpu.vector_store %arg3[%c0_271, %c2_272, %c0_273, %c0_274], %1071 {strides = array<i32>} : memref<1x3x8x128xf32, #tpu.memory_space<vmem>>, vector<1x1x8x128xf32>,
    %c0_275 = arith.constant 0 : index
    %c0_276 = arith.constant 0 : index
    %c0_277 = arith.constant 0 : index
    %c0_278 = arith.constant 0 : index
    %1072 = vector.load %arg4[%c0_275, %c0_276, %c0_277, %c0_278] : memref<1x9x8x128xf32, #tpu.memory_space<vmem>>, vector<1x1x8x128xf32>
    %1073 = vector.shape_cast %1072 : vector<1x1x8x128xf32> to vector<8x128xf32>
    %1074 = vector.shape_cast %1033 : vector<8x128xf32> to vector<1x1x8x128xf32>
    tpu.vector_store %arg4[%c0_275, %c0_276, %c0_277, %c0_278], %1074 {strides = array<i32>} : memref<1x9x8x128xf32, #tpu.memory_space<vmem>>, vector<1x1x8x128xf32>,
    %c0_279 = arith.constant 0 : index
    %c1_280 = arith.constant 1 : index
    %c0_281 = arith.constant 0 : index
    %c0_282 = arith.constant 0 : index
    %1075 = vector.load %arg4[%c0_279, %c1_280, %c0_281, %c0_282] : memref<1x9x8x128xf32, #tpu.memory_space<vmem>>, vector<1x1x8x128xf32>
    %1076 = vector.shape_cast %1075 : vector<1x1x8x128xf32> to vector<8x128xf32>
    %1077 = vector.shape_cast %1042 : vector<8x128xf32> to vector<1x1x8x128xf32>
    tpu.vector_store %arg4[%c0_279, %c1_280, %c0_281, %c0_282], %1077 {strides = array<i32>} : memref<1x9x8x128xf32, #tpu.memory_space<vmem>>, vector<1x1x8x128xf32>,
    %c0_283 = arith.constant 0 : index
    %c2_284 = arith.constant 2 : index
    %c0_285 = arith.constant 0 : index
    %c0_286 = arith.constant 0 : index
    %1078 = vector.load %arg4[%c0_283, %c2_284, %c0_285, %c0_286] : memref<1x9x8x128xf32, #tpu.memory_space<vmem>>, vector<1x1x8x128xf32>
    %1079 = vector.shape_cast %1078 : vector<1x1x8x128xf32> to vector<8x128xf32>
    %1080 = vector.shape_cast %1043 : vector<8x128xf32> to vector<1x1x8x128xf32>
    tpu.vector_store %arg4[%c0_283, %c2_284, %c0_285, %c0_286], %1080 {strides = array<i32>} : memref<1x9x8x128xf32, #tpu.memory_space<vmem>>, vector<1x1x8x128xf32>,
    %c0_287 = arith.constant 0 : index
    %c3_288 = arith.constant 3 : index
    %c0_289 = arith.constant 0 : index
    %c0_290 = arith.constant 0 : index
    %1081 = vector.load %arg4[%c0_287, %c3_288, %c0_289, %c0_290] : memref<1x9x8x128xf32, #tpu.memory_space<vmem>>, vector<1x1x8x128xf32>
    %1082 = vector.shape_cast %1081 : vector<1x1x8x128xf32> to vector<8x128xf32>
    %1083 = vector.shape_cast %1035 : vector<8x128xf32> to vector<1x1x8x128xf32>
    tpu.vector_store %arg4[%c0_287, %c3_288, %c0_289, %c0_290], %1083 {strides = array<i32>} : memref<1x9x8x128xf32, #tpu.memory_space<vmem>>, vector<1x1x8x128xf32>,
    %c0_291 = arith.constant 0 : index
    %c4_292 = arith.constant 4 : index
    %c0_293 = arith.constant 0 : index
    %c0_294 = arith.constant 0 : index
    %1084 = vector.load %arg4[%c0_291, %c4_292, %c0_293, %c0_294] : memref<1x9x8x128xf32, #tpu.memory_space<vmem>>, vector<1x1x8x128xf32>
    %1085 = vector.shape_cast %1084 : vector<1x1x8x128xf32> to vector<8x128xf32>
    %1086 = vector.shape_cast %1044 : vector<8x128xf32> to vector<1x1x8x128xf32>
    tpu.vector_store %arg4[%c0_291, %c4_292, %c0_293, %c0_294], %1086 {strides = array<i32>} : memref<1x9x8x128xf32, #tpu.memory_space<vmem>>, vector<1x1x8x128xf32>,
    %c0_295 = arith.constant 0 : index
    %c5_296 = arith.constant 5 : index
    %c0_297 = arith.constant 0 : index
    %c0_298 = arith.constant 0 : index
    %1087 = vector.load %arg4[%c0_295, %c5_296, %c0_297, %c0_298] : memref<1x9x8x128xf32, #tpu.memory_space<vmem>>, vector<1x1x8x128xf32>
    %1088 = vector.shape_cast %1087 : vector<1x1x8x128xf32> to vector<8x128xf32>
    %1089 = vector.shape_cast %1045 : vector<8x128xf32> to vector<1x1x8x128xf32>
    tpu.vector_store %arg4[%c0_295, %c5_296, %c0_297, %c0_298], %1089 {strides = array<i32>} : memref<1x9x8x128xf32, #tpu.memory_space<vmem>>, vector<1x1x8x128xf32>,
    %c0_299 = arith.constant 0 : index
    %c6_300 = arith.constant 6 : index
    %c0_301 = arith.constant 0 : index
    %c0_302 = arith.constant 0 : index
    %1090 = vector.load %arg4[%c0_299, %c6_300, %c0_301, %c0_302] : memref<1x9x8x128xf32, #tpu.memory_space<vmem>>, vector<1x1x8x128xf32>
    %1091 = vector.shape_cast %1090 : vector<1x1x8x128xf32> to vector<8x128xf32>
    %1092 = vector.shape_cast %1037 : vector<8x128xf32> to vector<1x1x8x128xf32>
    tpu.vector_store %arg4[%c0_299, %c6_300, %c0_301, %c0_302], %1092 {strides = array<i32>} : memref<1x9x8x128xf32, #tpu.memory_space<vmem>>, vector<1x1x8x128xf32>,
    %c0_303 = arith.constant 0 : index
    %c7_304 = arith.constant 7 : index
    %c0_305 = arith.constant 0 : index
    %c0_306 = arith.constant 0 : index
    %1093 = vector.load %arg4[%c0_303, %c7_304, %c0_305, %c0_306] : memref<1x9x8x128xf32, #tpu.memory_space<vmem>>, vector<1x1x8x128xf32>
    %1094 = vector.shape_cast %1093 : vector<1x1x8x128xf32> to vector<8x128xf32>
    %1095 = vector.shape_cast %1046 : vector<8x128xf32> to vector<1x1x8x128xf32>
    tpu.vector_store %arg4[%c0_303, %c7_304, %c0_305, %c0_306], %1095 {strides = array<i32>} : memref<1x9x8x128xf32, #tpu.memory_space<vmem>>, vector<1x1x8x128xf32>,
    %c0_307 = arith.constant 0 : index
    %c8_308 = arith.constant 8 : index
    %c0_309 = arith.constant 0 : index
    %c0_310 = arith.constant 0 : index
    %1096 = vector.load %arg4[%c0_307, %c8_308, %c0_309, %c0_310] : memref<1x9x8x128xf32, #tpu.memory_space<vmem>>, vector<1x1x8x128xf32>
    %1097 = vector.shape_cast %1096 : vector<1x1x8x128xf32> to vector<8x128xf32>
    %1098 = vector.shape_cast %1047 : vector<8x128xf32> to vector<1x1x8x128xf32>
    tpu.vector_store %arg4[%c0_307, %c8_308, %c0_309, %c0_310], %1098 {strides = array<i32>} : memref<1x9x8x128xf32, #tpu.memory_space<vmem>>, vector<1x1x8x128xf32>,
    return
  }
  func.func @transform_0(%arg0: i32) -> (i32, i32, i32, i32) {
    %c0_i32 = arith.constant 0 : i32
    %c0_i32_0 = arith.constant 0 : i32
    %c0_i32_1 = arith.constant 0 : i32
    %c0_i32_2 = arith.constant 0 : i32
    return %arg0, %c0_i32, %c0_i32_0, %c0_i32_1 : i32, i32, i32, i32
  }
  func.func @transform_1(%arg0: i32) -> (i32, i32, i32, i32) {
    %c0_i32 = arith.constant 0 : i32
    %c0_i32_0 = arith.constant 0 : i32
    %c0_i32_1 = arith.constant 0 : i32
    %c0_i32_2 = arith.constant 0 : i32
    return %arg0, %c0_i32, %c0_i32_0, %c0_i32_1 : i32, i32, i32, i32
  }
  func.func @transform_2(%arg0: i32) -> (i32, i32, i32, i32) {
    %c0_i32 = arith.constant 0 : i32
    %c0_i32_0 = arith.constant 0 : i32
    %c0_i32_1 = arith.constant 0 : i32
    %c0_i32_2 = arith.constant 0 : i32
    return %arg0, %c0_i32, %c0_i32_0, %c0_i32_1 : i32, i32, i32, i32
  }
  func.func @transform_3(%arg0: i32) -> (i32, i32, i32, i32) {
    %c0_i32 = arith.constant 0 : i32
    %c0_i32_0 = arith.constant 0 : i32
    %c0_i32_1 = arith.constant 0 : i32
    %c0_i32_2 = arith.constant 0 : i32
    return %arg0, %c0_i32, %c0_i32_0, %c0_i32_1 : i32, i32, i32, i32
  }
}

</mosaic_0001>

<llo_original>
// kernel: _lambda_.1
$region0: #{_lambda_.1}
  #allocation0 [shape = 'u32[]', space=smem, size = 0x4, offset = 0x4, fixed_abs, tag = 'smem constant byte address 0x4 - core index']
  #allocation1 [shape = 'u32[72,128]{1,0:T(1,128)}', space=vmem, size = 0x9000, scoped, tag = 'internal scratch']
  %s0 = inlined_call_operand.vmem [shape: f32[1,16,8,128], index: 0, kind: input, shape index: {}]
  %s1 = inlined_call_operand.vmem [shape: f32[1,6,8,128], index: 1, kind: input, shape index: {}]
  %s2 = inlined_call_operand.vmem [shape: f32[1,3,8,128], index: 2, kind: output, shape index: {0}]
  %s3 = inlined_call_operand.vmem [shape: f32[1,9,8,128], index: 3, kind: output, shape index: {1}]
  %4 = xla_tuple %s2, %s3
  %s5 = sld [smem:[#allocation0]]
  $region26: #{_lambda_.1} parent=0
    _
  %s7 = ssub.s32 1, %s5
  %s8 = scalar_select 0, %s7, %s5
  // Predicated region
  $region2: #{_lambda_.1} parent=0 // pred_check
    _
  $region3: #{_lambda_.1} parent=0 // pred_check_branch
    %10 = sbr.rel (0) target = $region5
  $region4: #{_lambda_.1} parent=0 // pred_region
    _
  $region5: #{_lambda_.1} parent=0 // pred_fallthru
    _
  // Predicated region
  $region6: #{_lambda_.1} parent=0 // pred_check
    _
  $region7: #{_lambda_.1} parent=0 // pred_check_branch
    %12 = sbr.rel (0) target = $region9
  $region8: #{_lambda_.1} parent=0 // pred_region
    _
  $region9: #{_lambda_.1} parent=0 // pred_fallthru
    _
  %v13 = vld [vmem:[%s0] sm:$0xff]
  %v14 = vmax.f32 %v13, 1.0135323e-09
  %v15 = vlog2.pop %v14
  %v16 = vmul.f32 %v15, 0.6931472
  %v17 = vmul.f32 %v16, 0.0005
  %v18 = vmul.f32 %v16, -1.08452934e-16
  %v19 = vmul.f32 %v16, -3.963997e-17
  %v20 = vmul.f32 %v16, 3.428789e-17
  %s21 = scalar_lea.vmem %s0, 8
  %v22 = vld [vmem:[%s21] sm:$0xff]
  %v23 = vmax.f32 %v22, 1.0135323e-09
  %v24 = vlog2.pop %v23
  %v25 = vmul.f32 %v24, 0.6931472
  %v26 = vmul.f32 %v25, 0.0005
  %v27 = vadd.f32 %v17, %v26
  %v28 = vmul.f32 %v25, -1.08424426e-16
  %v29 = vadd.f32 %v18, %v28
  %v30 = vmul.f32 %v25, -3.963627e-17
  %v31 = vadd.f32 %v19, %v30
  %v32 = vmul.f32 %v25, 3.4309602e-17
  %v33 = vadd.f32 %v20, %v32
  %s34 = scalar_lea.vmem %s0, 16
  %v35 = vld [vmem:[%s34] sm:$0xff]
  %v36 = vmax.f32 %v35, 1.0135323e-09
  %v37 = vlog2.pop %v36
  %v38 = vmul.f32 %v37, 0.6931472
  %v39 = vmul.f32 %v38, 9.950027e-05
  %v40 = vadd.f32 %v27, %v39
  %v41 = vmul.f32 %v38, 2.5312092e-05
  %v42 = vadd.f32 %v29, %v41
  %v43 = vmul.f32 %v38, 4.7739028e-05
  %v44 = vadd.f32 %v27, %v43
  %v45 = vmul.f32 %v38, -9.6020136e-05
  %v46 = vadd.f32 %v31, %v45
  %v47 = vmul.f32 %v38, 0.00015585324
  %v48 = vadd.f32 %v33, %v47
  %v49 = vmul.f32 %v38, -0.00036568058
  %v50 = vadd.f32 %v27, %v49
  %s51 = scalar_lea.vmem %s0, 24
  %v52 = vld [vmem:[%s51] sm:$0xff]
  %v53 = vmax.f32 %v52, 1.0135323e-09
  %v54 = vlog2.pop %v53
  %v55 = vmul.f32 %v54, 0.6931472
  %v56 = vmul.f32 %v55, -5.8914513e-05
  %v57 = vadd.f32 %v40, %v56
  %v58 = vmul.f32 %v55, 8.0924634e-05
  %v59 = vadd.f32 %v42, %v58
  %v60 = vmul.f32 %v55, 6.218733e-05
  %v61 = vadd.f32 %v44, %v60
  %v62 = vmul.f32 %v55, 0.00021307028
  %v63 = vadd.f32 %v46, %v62
  %v64 = vmul.f32 %v55, -0.00012385192
  %v65 = vadd.f32 %v48, %v64
  %v66 = vmul.f32 %v55, -0.00020891619
  %v67 = vadd.f32 %v50, %v66
  %s68 = scalar_lea.vmem %s0, 32
  %v69 = vld [vmem:[%s68] sm:$0xff]
  %v70 = vmax.f32 %v69, 1.0135323e-09
  %v71 = vlog2.pop %v70
  %v72 = vmul.f32 %v71, 0.6931472
  %v73 = vmul.f32 %v72, -0.00016962056
  %v74 = vadd.f32 %v57, %v73
  %v75 = vmul.f32 %v72, -8.303541e-05
  %v76 = vadd.f32 %v59, %v75
  %v77 = vmul.f32 %v72, 9.424606e-05
  %v78 = vadd.f32 %v61, %v77
  %v79 = vmul.f32 %v72, -0.0002616209
  %v80 = vadd.f32 %v63, %v79
  %v81 = vmul.f32 %v72, -7.7880206e-05
  %v82 = vadd.f32 %v65, %v81
  %v83 = vmul.f32 %v72, -0.00015733391
  %v84 = vadd.f32 %v67, %v83
  %s85 = scalar_lea.vmem %s0, 40
  %v86 = vld [vmem:[%s85] sm:$0xff]
  %v87 = vmax.f32 %v86, 1.0135323e-09
  %v88 = vlog2.pop %v87
  %v89 = vmul.f32 %v88, 0.6931472
  %v90 = vmul.f32 %v89, -6.45312e-06
  %v91 = vadd.f32 %v74, %v90
  %v92 = vmul.f32 %v89, -0.00017575297
  %v93 = vadd.f32 %v76, %v92
  %v94 = vmul.f32 %v89, -0.00019202038
  %v95 = vadd.f32 %v78, %v94
  %v96 = vmul.f32 %v89, 0.000117533746
  %v97 = vadd.f32 %v80, %v96
  %v98 = vmul.f32 %v89, 0.00019465589
  %v99 = vadd.f32 %v82, %v98
  %v100 = vmul.f32 %v89, 2.2602658e-06
  %v101 = vadd.f32 %v84, %v100
  %s102 = scalar_lea.vmem %s0, 48
  %v103 = vld [vmem:[%s102] sm:$0xff]
  %v104 = vmax.f32 %v103, 1.0135323e-09
  %v105 = vlog2.pop %v104
  %v106 = vmul.f32 %v105, 0.6931472
  %v107 = vmul.f32 %v106, 9.0445574e-05
  %v108 = vadd.f32 %v91, %v107
  %v109 = vmul.f32 %v106, 9.175773e-05
  %v110 = vadd.f32 %v93, %v109
  %v111 = vmul.f32 %v106, -0.000347387
  %v112 = vadd.f32 %v95, %v111
  %v113 = vmul.f32 %v106, 3.7620823e-05
  %v114 = vadd.f32 %v97, %v113
  %v115 = vmul.f32 %v106, -0.00017382482
  %v116 = vadd.f32 %v99, %v115
  %v117 = vmul.f32 %v106, 3.4965895e-05
  %v118 = vadd.f32 %v101, %v117
  %s119 = scalar_lea.vmem %s0, 56
  %v120 = vld [vmem:[%s119] sm:$0xff]
  %v121 = vmax.f32 %v120, 1.0135323e-09
  %v122 = vlog2.pop %v121
  %v123 = vmul.f32 %v122, 0.6931472
  %v124 = vmul.f32 %v123, -0.0002246459
  %v125 = vadd.f32 %v108, %v124
  %v126 = vmul.f32 %v123, 0.00024729295
  %v127 = vadd.f32 %v110, %v126
  %v128 = vmul.f32 %v123, -7.6061486e-05
  %v129 = vadd.f32 %v112, %v128
  %v130 = vmul.f32 %v123, -8.435452e-05
  %v131 = vadd.f32 %v114, %v130
  %v132 = vmul.f32 %v123, 7.0530434e-05
  %v133 = vadd.f32 %v116, %v132
  %v134 = vmul.f32 %v123, 8.041496e-05
  %v135 = vadd.f32 %v118, %v134
  %s136 = scalar_lea.vmem %s0, 64
  %v137 = vld [vmem:[%s136] sm:$0xff]
  %v138 = vmax.f32 %v137, 1.0135323e-09
  %v139 = vlog2.pop %v138
  %v140 = vmul.f32 %v139, 0.6931472
  %v141 = vmul.f32 %v140, -0.00041748123
  %v142 = vadd.f32 %v125, %v141
  %v143 = vmul.f32 %v140, -5.491167e-05
  %v144 = vadd.f32 %v127, %v143
  %v145 = vmul.f32 %v140, 9.84659e-05
  %v146 = vadd.f32 %v129, %v145
  %v147 = vmul.f32 %v140, 4.5255594e-05
  %v148 = vadd.f32 %v131, %v147
  %v149 = vmul.f32 %v140, 9.421543e-06
  %v150 = vadd.f32 %v133, %v149
  %v151 = vmul.f32 %v140, 0.00011428957
  %v152 = vadd.f32 %v135, %v151
  %s153 = scalar_lea.vmem %s0, 72
  %v154 = vld [vmem:[%s153] sm:$0xff]
  %v155 = vmax.f32 %v154, 1.0135323e-09
  %v156 = vlog2.pop %v155
  %v157 = vmul.f32 %v156, 0.6931472
  %v158 = vmul.f32 %v157, -0.0001238669
  %v159 = vadd.f32 %v142, %v158
  %v160 = vmul.f32 %v157, -0.00026133386
  %v161 = vadd.f32 %v144, %v160
  %v162 = vmul.f32 %v157, -0.00019514843
  %v163 = vadd.f32 %v146, %v162
  %v164 = vmul.f32 %v157, 3.3735236e-05
  %v165 = vadd.f32 %v148, %v164
  %v166 = vmul.f32 %v157, 3.1603297e-05
  %v167 = vadd.f32 %v150, %v166
  %v168 = vmul.f32 %v157, 0.00011428957
  %v169 = vadd.f32 %v152, %v168
  %s170 = scalar_lea.vmem %s0, 80
  %v171 = vld [vmem:[%s170] sm:$0xff]
  %v172 = vmax.f32 %v171, 1.0135323e-09
  %v173 = vlog2.pop %v172
  %v174 = vmul.f32 %v173, 0.6931472
  %v175 = vmul.f32 %v174, 0.00010748928
  %v176 = vadd.f32 %v159, %v175
  %v177 = vmul.f32 %v174, 1.3789115e-05
  %v178 = vadd.f32 %v161, %v177
  %v179 = vmul.f32 %v174, -0.00040819668
  %v180 = vadd.f32 %v163, %v179
  %v181 = vmul.f32 %v174, 9.183527e-06
  %v182 = vadd.f32 %v165, %v181
  %v183 = vmul.f32 %v174, -0.000109571396
  %v184 = vadd.f32 %v167, %v183
  %v185 = vmul.f32 %v174, 8.041496e-05
  %v186 = vadd.f32 %v169, %v185
  %s187 = scalar_lea.vmem %s0, 88
  %v188 = vld [vmem:[%s187] sm:$0xff]
  %v189 = vmax.f32 %v188, 1.0135323e-09
  %v190 = vlog2.pop %v189
  %v191 = vmul.f32 %v190, 0.6931472
  %v192 = vmul.f32 %v191, -0.0001162209
  %v193 = vadd.f32 %v176, %v192
  %v194 = vmul.f32 %v191, 0.00023705223
  %v195 = vadd.f32 %v178, %v194
  %v196 = vmul.f32 %v191, -0.0001407205
  %v197 = vadd.f32 %v180, %v196
  %v198 = vmul.f32 %v191, -0.00012056271
  %v199 = vadd.f32 %v182, %v198
  %v200 = vmul.f32 %v191, 0.00013074795
  %v201 = vadd.f32 %v184, %v200
  %v202 = vmul.f32 %v191, 3.4965895e-05
  %v203 = vadd.f32 %v186, %v202
  %s204 = scalar_lea.vmem %s0, 96
  %v205 = vld [vmem:[%s204] sm:$0xff]
  %v206 = vmax.f32 %v205, 1.0135323e-09
  %v207 = vlog2.pop %v206
  %v208 = vmul.f32 %v207, 0.6931472
  %v209 = vmul.f32 %v208, -0.00029602024
  %v210 = vadd.f32 %v193, %v209
  %v211 = vmul.f32 %v208, 2.7823877e-05
  %v212 = vadd.f32 %v195, %v211
  %v213 = vmul.f32 %v208, 9.7546734e-05
  %v214 = vadd.f32 %v197, %v213
  %v215 = vmul.f32 %v208, 0.00022683779
  %v216 = vadd.f32 %v199, %v215
  %v217 = vmul.f32 %v208, -1.5802387e-05
  %v218 = vadd.f32 %v201, %v217
  %v219 = vmul.f32 %v208, 2.2602658e-06
  %v220 = vadd.f32 %v203, %v219
  %s221 = scalar_lea.vmem %s0, 104
  %v222 = vld [vmem:[%s221] sm:$0xff]
  %v223 = vmax.f32 %v222, 1.0135323e-09
  %v224 = vlog2.pop %v223
  %v225 = vmul.f32 %v224, 0.6931472
  %v226 = vmul.f32 %v225, -7.116907e-05
  %v227 = vadd.f32 %v210, %v226
  %v228 = vmul.f32 %v225, -0.00015225059
  %v229 = vadd.f32 %v212, %v228
  %v230 = vmul.f32 %v225, -4.205416e-06
  %v231 = vadd.f32 %v214, %v230
  %v232 = vmul.f32 %v225, -0.00021417676
  %v233 = vadd.f32 %v216, %v232
  %v234 = vmul.f32 %v225, -0.00016923105
  %v235 = vadd.f32 %v218, %v234
  %v236 = vmul.f32 %v225, -0.00015733391
  %v237 = vadd.f32 %v220, %v236
  %s238 = scalar_lea.vmem %s0, 112
  %v239 = vld [vmem:[%s238] sm:$0xff]
  %v240 = vmax.f32 %v239, 1.0135323e-09
  %v241 = vlog2.pop %v240
  %v242 = vmul.f32 %v241, 0.6931472
  %v243 = vmul.f32 %v242, 9.827876e-05
  %v244 = vadd.f32 %v227, %v243
  %v245 = vmul.f32 %v242, -2.9588295e-05
  %v246 = vadd.f32 %v229, %v245
  %v247 = vmul.f32 %v242, -9.500594e-05
  %v248 = vadd.f32 %v231, %v247
  %v249 = vmul.f32 %v242, 2.1224383e-05
  %v250 = vadd.f32 %v233, %v249
  %v251 = vmul.f32 %v242, 0.0002455357
  %v252 = vadd.f32 %v235, %v251
  %v253 = vmul.f32 %v242, -0.00020891619
  %v254 = vadd.f32 %v237, %v253
  %s255 = scalar_lea.vmem %s0, 120
  %v256 = vld [vmem:[%s255] sm:$0xff]
  %v257 = vmax.f32 %v256, 1.0135323e-09
  %v258 = vlog2.pop %v257
  %v259 = vmul.f32 %v258, 0.6931472
  %v260 = vmul.f32 %v259, 8.867856e-05
  %v261 = vadd.f32 %v244, %v260
  %v262 = vmul.f32 %v259, 3.2920172e-05
  %v263 = vadd.f32 %v246, %v262
  %v264 = vmul.f32 %v259, 5.856074e-05
  %v265 = vadd.f32 %v248, %v264
  %v266 = vmul.f32 %v259, 7.2273666e-05
  %v267 = vadd.f32 %v250, %v266
  %v268 = vmul.f32 %v259, -0.00016818625
  %v269 = vadd.f32 %v252, %v268
  %v270 = vmul.f32 %v259, -0.00036568058
  %v271 = vadd.f32 %v254, %v270
  %v272 = vld [vmem:[%s1] sm:$0xff]
  %v273 = vadd.f32 %v261, %v272
  %s274 = scalar_lea.vmem %s1, 8
  %v275 = vld [vmem:[%s274] sm:$0xff]
  %v276 = vadd.f32 %v263, %v275
  %s277 = scalar_lea.vmem %s1, 16
  %v278 = vld [vmem:[%s277] sm:$0xff]
  %v279 = vadd.f32 %v267, %v278
  %s280 = scalar_lea.vmem %s1, 24
  %v281 = vld [vmem:[%s280] sm:$0xff]
  %v282 = vadd.f32 %v265, %v281
  %s283 = scalar_lea.vmem %s1, 32
  %v284 = vld [vmem:[%s283] sm:$0xff]
  %v285 = vadd.f32 %v269, %v284
  %s286 = scalar_lea.vmem %s1, 40
  %v287 = vld [vmem:[%s286] sm:$0xff]
  %v288 = vadd.f32 %v271, %v287
  %v289 = vsub.f32 %v282, %v273
  %vm290 = vcmp.ge.f32.partialorder %v289, 0.0
  %v291 = vsel %vm290, 1.0, -1.0
  %v292 = vadd.f32 %v276, %v276
  %v293 = vand.u32 2147483647, %v289
  %v294 = vmul.f32 %v289, %v289
  %v295 = vmul.f32 %v292, %v292
  %v296 = vadd.f32 %v294, %v295
  %v297 = vrsqrt.pop %v296
  %v298 = vmul.f32 %v297, %v296
  %v299 = vmul.f32 %v298, %v297
  %v300 = vmul.f32 0.5, %v299
  %v301 = vsub.f32 1.5, %v300
  %v302 = vmul.f32 %v297, %v301
  %v303 = vmul.f32 %v296, %v302
  %vm304 = vcmp.eq.f32.partialorder %v296, inf
  %v305 = vsel %vm304, %v296, %v303
  %vm306 = vcmp.eq.f32.partialorder %v296, 0.0
  %v307 = vand.u32 %v296, 2147483648
  %v308 = vsel %vm306, %v307, %v305
  %v309 = vadd.f32 %v293, %v308
  %v310 = vadd.f32 %v309, 1e-37
  %v311 = vrcp.pop %v310
  %v312 = vmul.f32 %v310, %v311
  %v313 = vsub.f32 2.0, %v312
  %v314 = vmul.f32 %v311, %v313
  %v315 = vmul.f32 %v292, %v291
  %v316 = vmul.f32 %v315, %v314
  %v317 = vmul.f32 %v316, %v316
  %v318 = vadd.f32 %v317, 1.0
  %v319 = vrsqrt.pop %v318
  %v320 = vmul.f32 %v319, %v318
  %v321 = vmul.f32 %v320, %v319
  %v322 = vmul.f32 0.5, %v321
  %v323 = vsub.f32 1.5, %v322
  %v324 = vmul.f32 %v319, %v323
  %vm325 = vweird.f32 %v318
  %vm326 = vweird.f32 %v319
  %vm327 = vmor %vm325, %vm326
  %v328 = vsel %vm327, %v319, %v324
  %v329 = vmul.f32 %v316, %v328
  %v330 = vmul.f32 %v316, %v276
  %v331 = vsub.f32 %v273, %v330
  %v332 = vadd.f32 %v282, %v330
  %v333 = vmul.f32 %v328, %v279
  %v334 = vmul.f32 %v329, %v285
  %v335 = vsub.f32 %v333, %v334
  %v336 = vmul.f32 %v329, %v279
  %v337 = vmul.f32 %v328, %v285
  %v338 = vadd.f32 %v336, %v337
  %v339 = vmul.f32 %v329, 0.0
  %v340 = vsub.f32 %v328, %v339
  %v341 = vmul.f32 %v328, 0.0
  %v342 = vadd.f32 %v329, %v341
  %v343 = vsub.f32 %v341, %v329
  %v344 = vadd.f32 %v339, %v328
  %v345 = vsub.f32 %v341, %v339
  %v346 = vadd.f32 %v339, %v341
  %v347 = vsub.f32 %v288, %v331
  %vm348 = vcmp.ge.f32.partialorder %v347, 0.0
  %v349 = vsel %vm348, 1.0, -1.0
  %v350 = vadd.f32 %v335, %v335
  %v351 = vand.u32 2147483647, %v347
  %v352 = vmul.f32 %v347, %v347
  %v353 = vmul.f32 %v350, %v350
  %v354 = vadd.f32 %v352, %v353
  %v355 = vrsqrt.pop %v354
  %v356 = vmul.f32 %v355, %v354
  %v357 = vmul.f32 %v356, %v355
  %v358 = vmul.f32 0.5, %v357
  %v359 = vsub.f32 1.5, %v358
  %v360 = vmul.f32 %v355, %v359
  %v361 = vmul.f32 %v354, %v360
  %vm362 = vcmp.eq.f32.partialorder %v354, inf
  %v363 = vsel %vm362, %v354, %v361
  %vm364 = vcmp.eq.f32.partialorder %v354, 0.0
  %v365 = vand.u32 %v354, 2147483648
  %v366 = vsel %vm364, %v365, %v363
  %v367 = vadd.f32 %v351, %v366
  %v368 = vadd.f32 %v367, 1e-37
  %v369 = vrcp.pop %v368
  %v370 = vmul.f32 %v368, %v369
  %v371 = vsub.f32 2.0, %v370
  %v372 = vmul.f32 %v369, %v371
  %v373 = vmul.f32 %v350, %v349
  %v374 = vmul.f32 %v373, %v372
  %v375 = vmul.f32 %v374, %v374
  %v376 = vadd.f32 %v375, 1.0
  %v377 = vrsqrt.pop %v376
  %v378 = vmul.f32 %v377, %v376
  %v379 = vmul.f32 %v378, %v377
  %v380 = vmul.f32 0.5, %v379
  %v381 = vsub.f32 1.5, %v380
  %v382 = vmul.f32 %v377, %v381
  %vm383 = vweird.f32 %v376
  %vm384 = vweird.f32 %v377
  %vm385 = vmor %vm383, %vm384
  %v386 = vsel %vm385, %v377, %v382
  %v387 = vmul.f32 %v374, %v386
  %v388 = vmul.f32 %v374, %v335
  %v389 = vsub.f32 %v331, %v388
  %v390 = vadd.f32 %v288, %v388
  %v391 = vmul.f32 %v386, 0.0
  %v392 = vmul.f32 %v387, %v338
  %v393 = vsub.f32 %v391, %v392
  %v394 = vmul.f32 %v387, 0.0
  %v395 = vmul.f32 %v386, %v338
  %v396 = vadd.f32 %v394, %v395
  %v397 = vmul.f32 %v386, %v340
  %v398 = vsub.f32 %v397, %v394
  %v399 = vmul.f32 %v387, %v340
  %v400 = vadd.f32 %v399, %v391
  %v401 = vmul.f32 %v386, %v343
  %v402 = vsub.f32 %v401, %v394
  %v403 = vmul.f32 %v387, %v343
  %v404 = vadd.f32 %v403, %v391
  %v405 = vmul.f32 %v386, %v345
  %v406 = vsub.f32 %v405, %v387
  %v407 = vmul.f32 %v387, %v345
  %v408 = vadd.f32 %v407, %v386
  %v409 = vsub.f32 %v390, %v332
  %vm410 = vcmp.ge.f32.partialorder %v409, 0.0
  %v411 = vsel %vm410, 1.0, -1.0
  %v412 = vadd.f32 %v396, %v396
  %v413 = vand.u32 2147483647, %v409
  %v414 = vmul.f32 %v409, %v409
  %v415 = vmul.f32 %v412, %v412
  %v416 = vadd.f32 %v414, %v415
  %v417 = vrsqrt.pop %v416
  %v418 = vmul.f32 %v417, %v416
  %v419 = vmul.f32 %v418, %v417
  %v420 = vmul.f32 0.5, %v419
  %v421 = vsub.f32 1.5, %v420
  %v422 = vmul.f32 %v417, %v421
  %v423 = vmul.f32 %v416, %v422
  %vm424 = vcmp.eq.f32.partialorder %v416, inf
  %v425 = vsel %vm424, %v416, %v423
  %vm426 = vcmp.eq.f32.partialorder %v416, 0.0
  %v427 = vand.u32 %v416, 2147483648
  %v428 = vsel %vm426, %v427, %v425
  %v429 = vadd.f32 %v413, %v428
  %v430 = vadd.f32 %v429, 1e-37
  %v431 = vrcp.pop %v430
  %v432 = vmul.f32 %v430, %v431
  %v433 = vsub.f32 2.0, %v432
  %v434 = vmul.f32 %v431, %v433
  %v435 = vmul.f32 %v412, %v411
  %v436 = vmul.f32 %v435, %v434
  %v437 = vmul.f32 %v436, %v436
  %v438 = vadd.f32 %v437, 1.0
  %v439 = vrsqrt.pop %v438
  %v440 = vmul.f32 %v439, %v438
  %v441 = vmul.f32 %v440, %v439
  %v442 = vmul.f32 0.5, %v441
  %v443 = vsub.f32 1.5, %v442
  %v444 = vmul.f32 %v439, %v443
  %vm445 = vweird.f32 %v438
  %vm446 = vweird.f32 %v439
  %vm447 = vmor %vm445, %vm446
  %v448 = vsel %vm447, %v439, %v444
  %v449 = vmul.f32 %v436, %v448
  %v450 = vmul.f32 %v436, %v396
  %v451 = vsub.f32 %v332, %v450
  %v452 = vadd.f32 %v390, %v450
  %v453 = vmul.f32 %v448, %v393
  %v454 = vmul.f32 %v449, 0.0
  %v455 = vsub.f32 %v453, %v454
  %v456 = vmul.f32 %v449, %v393
  %v457 = vmul.f32 %v448, 0.0
  %v458 = vadd.f32 %v456, %v457
  %v459 = vmul.f32 %v448, %v342
  %v460 = vmul.f32 %v449, %v400
  %v461 = vsub.f32 %v459, %v460
  %v462 = vmul.f32 %v449, %v342
  %v463 = vmul.f32 %v448, %v400
  %v464 = vadd.f32 %v462, %v463
  %v465 = vmul.f32 %v448, %v344
  %v466 = vmul.f32 %v449, %v404
  %v467 = vsub.f32 %v465, %v466
  %v468 = vmul.f32 %v449, %v344
  %v469 = vmul.f32 %v448, %v404
  %v470 = vadd.f32 %v468, %v469
  %v471 = vmul.f32 %v448, %v346
  %v472 = vmul.f32 %v449, %v408
  %v473 = vsub.f32 %v471, %v472
  %v474 = vmul.f32 %v449, %v346
  %v475 = vmul.f32 %v448, %v408
  %v476 = vadd.f32 %v474, %v475
  %v477 = vsub.f32 %v451, %v389
  %vm478 = vcmp.ge.f32.partialorder %v477, 0.0
  %v479 = vsel %vm478, 1.0, -1.0
  %v480 = vadd.f32 %v455, %v455
  %v481 = vand.u32 2147483647, %v477
  %v482 = vmul.f32 %v477, %v477
  %v483 = vmul.f32 %v480, %v480
  %v484 = vadd.f32 %v482, %v483
  %v485 = vrsqrt.pop %v484
  %v486 = vmul.f32 %v485, %v484
  %v487 = vmul.f32 %v486, %v485
  %v488 = vmul.f32 0.5, %v487
  %v489 = vsub.f32 1.5, %v488
  %v490 = vmul.f32 %v485, %v489
  %v491 = vmul.f32 %v484, %v490
  %vm492 = vcmp.eq.f32.partialorder %v484, inf
  %v493 = vsel %vm492, %v484, %v491
  %vm494 = vcmp.eq.f32.partialorder %v484, 0.0
  %v495 = vand.u32 %v484, 2147483648
  %v496 = vsel %vm494, %v495, %v493
  %v497 = vadd.f32 %v481, %v496
  %v498 = vadd.f32 %v497, 1e-37
  %v499 = vrcp.pop %v498
  %v500 = vmul.f32 %v498, %v499
  %v501 = vsub.f32 2.0, %v500
  %v502 = vmul.f32 %v499, %v501
  %v503 = vmul.f32 %v480, %v479
  %v504 = vmul.f32 %v503, %v502
  %v505 = vmul.f32 %v504, %v504
  %v506 = vadd.f32 %v505, 1.0
  %v507 = vrsqrt.pop %v506
  %v508 = vmul.f32 %v507, %v506
  %v509 = vmul.f32 %v508, %v507
  %v510 = vmul.f32 0.5, %v509
  %v511 = vsub.f32 1.5, %v510
  %v512 = vmul.f32 %v507, %v511
  %vm513 = vweird.f32 %v506
  %vm514 = vweird.f32 %v507
  %vm515 = vmor %vm513, %vm514
  %v516 = vsel %vm515, %v507, %v512
  %v517 = vmul.f32 %v504, %v516
  %v518 = vmul.f32 %v504, %v455
  %v519 = vsub.f32 %v389, %v518
  %v520 = vadd.f32 %v451, %v518
  %v521 = vmul.f32 %v516, %v458
  %v522 = vmul.f32 %v517, 0.0
  %v523 = vsub.f32 %v521, %v522
  %v524 = vmul.f32 %v517, %v458
  %v525 = vmul.f32 %v516, 0.0
  %v526 = vadd.f32 %v524, %v525
  %v527 = vmul.f32 %v516, %v398
  %v528 = vmul.f32 %v517, %v461
  %v529 = vsub.f32 %v527, %v528
  %v530 = vmul.f32 %v517, %v398
  %v531 = vmul.f32 %v516, %v461
  %v532 = vadd.f32 %v530, %v531
  %v533 = vmul.f32 %v516, %v402
  %v534 = vmul.f32 %v517, %v467
  %v535 = vsub.f32 %v533, %v534
  %v536 = vmul.f32 %v517, %v402
  %v537 = vmul.f32 %v516, %v467
  %v538 = vadd.f32 %v536, %v537
  %v539 = vmul.f32 %v516, %v406
  %v540 = vmul.f32 %v517, %v473
  %v541 = vsub.f32 %v539, %v540
  %v542 = vmul.f32 %v517, %v406
  %v543 = vmul.f32 %v516, %v473
  %v544 = vadd.f32 %v542, %v543
  %v545 = vsub.f32 %v452, %v519
  %vm546 = vcmp.ge.f32.partialorder %v545, 0.0
  %v547 = vsel %vm546, 1.0, -1.0
  %v548 = vadd.f32 %v523, %v523
  %v549 = vand.u32 2147483647, %v545
  %v550 = vmul.f32 %v545, %v545
  %v551 = vmul.f32 %v548, %v548
  %v552 = vadd.f32 %v550, %v551
  %v553 = vrsqrt.pop %v552
  %v554 = vmul.f32 %v553, %v552
  %v555 = vmul.f32 %v554, %v553
  %v556 = vmul.f32 0.5, %v555
  %v557 = vsub.f32 1.5, %v556
  %v558 = vmul.f32 %v553, %v557
  %v559 = vmul.f32 %v552, %v558
  %vm560 = vcmp.eq.f32.partialorder %v552, inf
  %v561 = vsel %vm560, %v552, %v559
  %vm562 = vcmp.eq.f32.partialorder %v552, 0.0
  %v563 = vand.u32 %v552, 2147483648
  %v564 = vsel %vm562, %v563, %v561
  %v565 = vadd.f32 %v549, %v564
  %v566 = vadd.f32 %v565, 1e-37
  %v567 = vrcp.pop %v566
  %v568 = vmul.f32 %v566, %v567
  %v569 = vsub.f32 2.0, %v568
  %v570 = vmul.f32 %v567, %v569
  %v571 = vmul.f32 %v548, %v547
  %v572 = vmul.f32 %v571, %v570
  %v573 = vmul.f32 %v572, %v572
  %v574 = vadd.f32 %v573, 1.0
  %v575 = vrsqrt.pop %v574
  %v576 = vmul.f32 %v575, %v574
  %v577 = vmul.f32 %v576, %v575
  %v578 = vmul.f32 0.5, %v577
  %v579 = vsub.f32 1.5, %v578
  %v580 = vmul.f32 %v575, %v579
  %vm581 = vweird.f32 %v574
  %vm582 = vweird.f32 %v575
  %vm583 = vmor %vm581, %vm582
  %v584 = vsel %vm583, %v575, %v580
  %v585 = vmul.f32 %v572, %v584
  %v586 = vmul.f32 %v572, %v523
  %v587 = vsub.f32 %v519, %v586
  %v588 = vadd.f32 %v452, %v586
  %v589 = vmul.f32 %v584, 0.0
  %v590 = vmul.f32 %v585, %v526
  %v591 = vsub.f32 %v589, %v590
  %v592 = vmul.f32 %v585, 0.0
  %v593 = vmul.f32 %v584, %v526
  %v594 = vadd.f32 %v592, %v593
  %v595 = vmul.f32 %v584, %v529
  %v596 = vmul.f32 %v585, %v464
  %v597 = vsub.f32 %v595, %v596
  %v598 = vmul.f32 %v585, %v529
  %v599 = vmul.f32 %v584, %v464
  %v600 = vadd.f32 %v598, %v599
  %v601 = vmul.f32 %v584, %v535
  %v602 = vmul.f32 %v585, %v470
  %v603 = vsub.f32 %v601, %v602
  %v604 = vmul.f32 %v585, %v535
  %v605 = vmul.f32 %v584, %v470
  %v606 = vadd.f32 %v604, %v605
  %v607 = vmul.f32 %v584, %v541
  %v608 = vmul.f32 %v585, %v476
  %v609 = vsub.f32 %v607, %v608
  %v610 = vmul.f32 %v585, %v541
  %v611 = vmul.f32 %v584, %v476
  %v612 = vadd.f32 %v610, %v611
  %v613 = vsub.f32 %v588, %v520
  %vm614 = vcmp.ge.f32.partialorder %v613, 0.0
  %v615 = vsel %vm614, 1.0, -1.0
  %v616 = vadd.f32 %v594, %v594
  %v617 = vand.u32 2147483647, %v613
  %v618 = vmul.f32 %v613, %v613
  %v619 = vmul.f32 %v616, %v616
  %v620 = vadd.f32 %v618, %v619
  %v621 = vrsqrt.pop %v620
  %v622 = vmul.f32 %v621, %v620
  %v623 = vmul.f32 %v622, %v621
  %v624 = vmul.f32 0.5, %v623
  %v625 = vsub.f32 1.5, %v624
  %v626 = vmul.f32 %v621, %v625
  %v627 = vmul.f32 %v620, %v626
  %vm628 = vcmp.eq.f32.partialorder %v620, inf
  %v629 = vsel %vm628, %v620, %v627
  %vm630 = vcmp.eq.f32.partialorder %v620, 0.0
  %v631 = vand.u32 %v620, 2147483648
  %v632 = vsel %vm630, %v631, %v629
  %v633 = vadd.f32 %v617, %v632
  %v634 = vadd.f32 %v633, 1e-37
  %v635 = vrcp.pop %v634
  %v636 = vmul.f32 %v634, %v635
  %v637 = vsub.f32 2.0, %v636
  %v638 = vmul.f32 %v635, %v637
  %v639 = vmul.f32 %v616, %v615
  %v640 = vmul.f32 %v639, %v638
  %v641 = vmul.f32 %v640, %v640
  %v642 = vadd.f32 %v641, 1.0
  %v643 = vrsqrt.pop %v642
  %v644 = vmul.f32 %v643, %v642
  %v645 = vmul.f32 %v644, %v643
  %v646 = vmul.f32 0.5, %v645
  %v647 = vsub.f32 1.5, %v646
  %v648 = vmul.f32 %v643, %v647
  %vm649 = vweird.f32 %v642
  %vm650 = vweird.f32 %v643
  %vm651 = vmor %vm649, %vm650
  %v652 = vsel %vm651, %v643, %v648
  %v653 = vmul.f32 %v640, %v652
  %v654 = vmul.f32 %v640, %v594
  %v655 = vsub.f32 %v520, %v654
  %v656 = vadd.f32 %v588, %v654
  %v657 = vmul.f32 %v652, %v591
  %v658 = vmul.f32 %v653, 0.0
  %v659 = vsub.f32 %v657, %v658
  %v660 = vmul.f32 %v653, %v591
  %v661 = vmul.f32 %v652, 0.0
  %v662 = vadd.f32 %v660, %v661
  %v663 = vmul.f32 %v652, %v532
  %v664 = vmul.f32 %v653, %v600
  %v665 = vsub.f32 %v663, %v664
  %v666 = vmul.f32 %v653, %v532
  %v667 = vmul.f32 %v652, %v600
  %v668 = vadd.f32 %v666, %v667
  %v669 = vmul.f32 %v652, %v538
  %v670 = vmul.f32 %v653, %v606
  %v671 = vsub.f32 %v669, %v670
  %v672 = vmul.f32 %v653, %v538
  %v673 = vmul.f32 %v652, %v606
  %v674 = vadd.f32 %v672, %v673
  %v675 = vmul.f32 %v652, %v544
  %v676 = vmul.f32 %v653, %v612
  %v677 = vsub.f32 %v675, %v676
  %v678 = vmul.f32 %v653, %v544
  %v679 = vmul.f32 %v652, %v612
  %v680 = vadd.f32 %v678, %v679
  %v681 = vsub.f32 %v655, %v587
  %vm682 = vcmp.ge.f32.partialorder %v681, 0.0
  %v683 = vsel %vm682, 1.0, -1.0
  %v684 = vadd.f32 %v659, %v659
  %v685 = vand.u32 2147483647, %v681
  %v686 = vmul.f32 %v681, %v681
  %v687 = vmul.f32 %v684, %v684
  %v688 = vadd.f32 %v686, %v687
  %v689 = vrsqrt.pop %v688
  %v690 = vmul.f32 %v689, %v688
  %v691 = vmul.f32 %v690, %v689
  %v692 = vmul.f32 0.5, %v691
  %v693 = vsub.f32 1.5, %v692
  %v694 = vmul.f32 %v689, %v693
  %v695 = vmul.f32 %v688, %v694
  %vm696 = vcmp.eq.f32.partialorder %v688, inf
  %v697 = vsel %vm696, %v688, %v695
  %vm698 = vcmp.eq.f32.partialorder %v688, 0.0
  %v699 = vand.u32 %v688, 2147483648
  %v700 = vsel %vm698, %v699, %v697
  %v701 = vadd.f32 %v685, %v700
  %v702 = vadd.f32 %v701, 1e-37
  %v703 = vrcp.pop %v702
  %v704 = vmul.f32 %v702, %v703
  %v705 = vsub.f32 2.0, %v704
  %v706 = vmul.f32 %v703, %v705
  %v707 = vmul.f32 %v684, %v683
  %v708 = vmul.f32 %v707, %v706
  %v709 = vmul.f32 %v708, %v708
  %v710 = vadd.f32 %v709, 1.0
  %v711 = vrsqrt.pop %v710
  %v712 = vmul.f32 %v711, %v710
  %v713 = vmul.f32 %v712, %v711
  %v714 = vmul.f32 0.5, %v713
  %v715 = vsub.f32 1.5, %v714
  %v716 = vmul.f32 %v711, %v715
  %vm717 = vweird.f32 %v710
  %vm718 = vweird.f32 %v711
  %vm719 = vmor %vm717, %vm718
  %v720 = vsel %vm719, %v711, %v716
  %v721 = vmul.f32 %v708, %v720
  %v722 = vmul.f32 %v708, %v659
  %v723 = vsub.f32 %v587, %v722
  %v724 = vadd.f32 %v655, %v722
  %v725 = vmul.f32 %v720, %v662
  %v726 = vmul.f32 %v721, 0.0
  %v727 = vsub.f32 %v725, %v726
  %v728 = vmul.f32 %v721, %v662
  %v729 = vmul.f32 %v720, 0.0
  %v730 = vadd.f32 %v728, %v729
  %v731 = vmul.f32 %v720, %v597
  %v732 = vmul.f32 %v721, %v665
  %v733 = vsub.f32 %v731, %v732
  %v734 = vmul.f32 %v721, %v597
  %v735 = vmul.f32 %v720, %v665
  %v736 = vadd.f32 %v734, %v735
  %v737 = vmul.f32 %v720, %v603
  %v738 = vmul.f32 %v721, %v671
  %v739 = vsub.f32 %v737, %v738
  %v740 = vmul.f32 %v721, %v603
  %v741 = vmul.f32 %v720, %v671
  %v742 = vadd.f32 %v740, %v741
  %v743 = vmul.f32 %v720, %v609
  %v744 = vmul.f32 %v721, %v677
  %v745 = vsub.f32 %v743, %v744
  %v746 = vmul.f32 %v721, %v609
  %v747 = vmul.f32 %v720, %v677
  %v748 = vadd.f32 %v746, %v747
  %v749 = vsub.f32 %v656, %v723
  %vm750 = vcmp.ge.f32.partialorder %v749, 0.0
  %v751 = vsel %vm750, 1.0, -1.0
  %v752 = vadd.f32 %v727, %v727
  %v753 = vand.u32 2147483647, %v749
  %v754 = vmul.f32 %v749, %v749
  %v755 = vmul.f32 %v752, %v752
  %v756 = vadd.f32 %v754, %v755
  %v757 = vrsqrt.pop %v756
  %v758 = vmul.f32 %v757, %v756
  %v759 = vmul.f32 %v758, %v757
  %v760 = vmul.f32 0.5, %v759
  %v761 = vsub.f32 1.5, %v760
  %v762 = vmul.f32 %v757, %v761
  %v763 = vmul.f32 %v756, %v762
  %vm764 = vcmp.eq.f32.partialorder %v756, inf
  %v765 = vsel %vm764, %v756, %v763
  %vm766 = vcmp.eq.f32.partialorder %v756, 0.0
  %v767 = vand.u32 %v756, 2147483648
  %v768 = vsel %vm766, %v767, %v765
  %v769 = vadd.f32 %v753, %v768
  %v770 = vadd.f32 %v769, 1e-37
  %v771 = vrcp.pop %v770
  %v772 = vmul.f32 %v770, %v771
  %v773 = vsub.f32 2.0, %v772
  %v774 = vmul.f32 %v771, %v773
  %v775 = vmul.f32 %v752, %v751
  %v776 = vmul.f32 %v775, %v774
  %v777 = vmul.f32 %v776, %v776
  %v778 = vadd.f32 %v777, 1.0
  %v779 = vrsqrt.pop %v778
  %v780 = vmul.f32 %v779, %v778
  %v781 = vmul.f32 %v780, %v779
  %v782 = vmul.f32 0.5, %v781
  %v783 = vsub.f32 1.5, %v782
  %v784 = vmul.f32 %v779, %v783
  %vm785 = vweird.f32 %v778
  %vm786 = vweird.f32 %v779
  %vm787 = vmor %vm785, %vm786
  %v788 = vsel %vm787, %v779, %v784
  %v789 = vmul.f32 %v776, %v788
  %v790 = vmul.f32 %v776, %v727
  %v791 = vsub.f32 %v723, %v790
  %v792 = vadd.f32 %v656, %v790
  %v793 = vmul.f32 %v788, 0.0
  %v794 = vmul.f32 %v789, %v730
  %v795 = vsub.f32 %v793, %v794
  %v796 = vmul.f32 %v789, 0.0
  %v797 = vmul.f32 %v788, %v730
  %v798 = vadd.f32 %v796, %v797
  %v799 = vmul.f32 %v788, %v733
  %v800 = vmul.f32 %v789, %v668
  %v801 = vsub.f32 %v799, %v800
  %v802 = vmul.f32 %v789, %v733
  %v803 = vmul.f32 %v788, %v668
  %v804 = vadd.f32 %v802, %v803
  %v805 = vmul.f32 %v788, %v739
  %v806 = vmul.f32 %v789, %v674
  %v807 = vsub.f32 %v805, %v806
  %v808 = vmul.f32 %v789, %v739
  %v809 = vmul.f32 %v788, %v674
  %v810 = vadd.f32 %v808, %v809
  %v811 = vmul.f32 %v788, %v745
  %v812 = vmul.f32 %v789, %v680
  %v813 = vsub.f32 %v811, %v812
  %v814 = vmul.f32 %v789, %v745
  %v815 = vmul.f32 %v788, %v680
  %v816 = vadd.f32 %v814, %v815
  %v817 = vsub.f32 %v792, %v724
  %vm818 = vcmp.ge.f32.partialorder %v817, 0.0
  %v819 = vsel %vm818, 1.0, -1.0
  %v820 = vadd.f32 %v798, %v798
  %v821 = vand.u32 2147483647, %v817
  %v822 = vmul.f32 %v817, %v817
  %v823 = vmul.f32 %v820, %v820
  %v824 = vadd.f32 %v822, %v823
  %v825 = vrsqrt.pop %v824
  %v826 = vmul.f32 %v825, %v824
  %v827 = vmul.f32 %v826, %v825
  %v828 = vmul.f32 0.5, %v827
  %v829 = vsub.f32 1.5, %v828
  %v830 = vmul.f32 %v825, %v829
  %v831 = vmul.f32 %v824, %v830
  %vm832 = vcmp.eq.f32.partialorder %v824, inf
  %v833 = vsel %vm832, %v824, %v831
  %vm834 = vcmp.eq.f32.partialorder %v824, 0.0
  %v835 = vand.u32 %v824, 2147483648
  %v836 = vsel %vm834, %v835, %v833
  %v837 = vadd.f32 %v821, %v836
  %v838 = vadd.f32 %v837, 1e-37
  %v839 = vrcp.pop %v838
  %v840 = vmul.f32 %v838, %v839
  %v841 = vsub.f32 2.0, %v840
  %v842 = vmul.f32 %v839, %v841
  %v843 = vmul.f32 %v820, %v819
  %v844 = vmul.f32 %v843, %v842
  %v845 = vmul.f32 %v844, %v844
  %v846 = vadd.f32 %v845, 1.0
  %v847 = vrsqrt.pop %v846
  %v848 = vmul.f32 %v847, %v846
  %v849 = vmul.f32 %v848, %v847
  %v850 = vmul.f32 0.5, %v849
  %v851 = vsub.f32 1.5, %v850
  %v852 = vmul.f32 %v847, %v851
  %vm853 = vweird.f32 %v846
  %vm854 = vweird.f32 %v847
  %vm855 = vmor %vm853, %vm854
  %v856 = vsel %vm855, %v847, %v852
  %v857 = vmul.f32 %v844, %v856
  %v858 = vmul.f32 %v844, %v798
  %v859 = vsub.f32 %v724, %v858
  %v860 = vadd.f32 %v792, %v858
  %v861 = vmul.f32 %v856, %v795
  %v862 = vmul.f32 %v857, 0.0
  %v863 = vsub.f32 %v861, %v862
  %v864 = vmul.f32 %v857, %v795
  %v865 = vmul.f32 %v856, 0.0
  %v866 = vadd.f32 %v864, %v865
  %v867 = vmul.f32 %v856, %v736
  %v868 = vmul.f32 %v857, %v804
  %v869 = vsub.f32 %v867, %v868
  %v870 = vmul.f32 %v857, %v736
  %v871 = vmul.f32 %v856, %v804
  %v872 = vadd.f32 %v870, %v871
  %v873 = vmul.f32 %v856, %v742
  %v874 = vmul.f32 %v857, %v810
  %v875 = vsub.f32 %v873, %v874
  %v876 = vmul.f32 %v857, %v742
  %v877 = vmul.f32 %v856, %v810
  %v878 = vadd.f32 %v876, %v877
  %v879 = vmul.f32 %v856, %v748
  %v880 = vmul.f32 %v857, %v816
  %v881 = vsub.f32 %v879, %v880
  %v882 = vmul.f32 %v857, %v748
  %v883 = vmul.f32 %v856, %v816
  %v884 = vadd.f32 %v882, %v883
  %v885 = vsub.f32 %v859, %v791
  %vm886 = vcmp.ge.f32.partialorder %v885, 0.0
  %v887 = vsel %vm886, 1.0, -1.0
  %v888 = vadd.f32 %v863, %v863
  %v889 = vand.u32 2147483647, %v885
  %v890 = vmul.f32 %v885, %v885
  %v891 = vmul.f32 %v888, %v888
  %v892 = vadd.f32 %v890, %v891
  %v893 = vrsqrt.pop %v892
  %v894 = vmul.f32 %v893, %v892
  %v895 = vmul.f32 %v894, %v893
  %v896 = vmul.f32 0.5, %v895
  %v897 = vsub.f32 1.5, %v896
  %v898 = vmul.f32 %v893, %v897
  %v899 = vmul.f32 %v892, %v898
  %vm900 = vcmp.eq.f32.partialorder %v892, inf
  %v901 = vsel %vm900, %v892, %v899
  %vm902 = vcmp.eq.f32.partialorder %v892, 0.0
  %v903 = vand.u32 %v892, 2147483648
  %v904 = vsel %vm902, %v903, %v901
  %v905 = vadd.f32 %v889, %v904
  %v906 = vadd.f32 %v905, 1e-37
  %v907 = vrcp.pop %v906
  %v908 = vmul.f32 %v906, %v907
  %v909 = vsub.f32 2.0, %v908
  %v910 = vmul.f32 %v907, %v909
  %v911 = vmul.f32 %v888, %v887
  %v912 = vmul.f32 %v911, %v910
  %v913 = vmul.f32 %v912, %v912
  %v914 = vadd.f32 %v913, 1.0
  %v915 = vrsqrt.pop %v914
  %v916 = vmul.f32 %v915, %v914
  %v917 = vmul.f32 %v916, %v915
  %v918 = vmul.f32 0.5, %v917
  %v919 = vsub.f32 1.5, %v918
  %v920 = vmul.f32 %v915, %v919
  %vm921 = vweird.f32 %v914
  %vm922 = vweird.f32 %v915
  %vm923 = vmor %vm921, %vm922
  %v924 = vsel %vm923, %v915, %v920
  %v925 = vmul.f32 %v912, %v924
  %v926 = vmul.f32 %v912, %v863
  %v927 = vsub.f32 %v791, %v926
  %v928 = vadd.f32 %v859, %v926
  %v929 = vmul.f32 %v924, %v866
  %v930 = vmul.f32 %v925, 0.0
  %v931 = vsub.f32 %v929, %v930
  %v932 = vmul.f32 %v925, %v866
  %v933 = vmul.f32 %v924, 0.0
  %v934 = vadd.f32 %v932, %v933
  %v935 = vmul.f32 %v924, %v801
  %v936 = vmul.f32 %v925, %v869
  %v937 = vsub.f32 %v935, %v936
  %v938 = vmul.f32 %v925, %v801
  %v939 = vmul.f32 %v924, %v869
  %v940 = vadd.f32 %v938, %v939
  %v941 = vmul.f32 %v924, %v807
  %v942 = vmul.f32 %v925, %v875
  %v943 = vsub.f32 %v941, %v942
  %v944 = vmul.f32 %v925, %v807
  %v945 = vmul.f32 %v924, %v875
  %v946 = vadd.f32 %v944, %v945
  %v947 = vmul.f32 %v924, %v813
  %v948 = vmul.f32 %v925, %v881
  %v949 = vsub.f32 %v947, %v948
  %v950 = vmul.f32 %v925, %v813
  %v951 = vmul.f32 %v924, %v881
  %v952 = vadd.f32 %v950, %v951
  %v953 = vsub.f32 %v860, %v927
  %vm954 = vcmp.ge.f32.partialorder %v953, 0.0
  %v955 = vsel %vm954, 1.0, -1.0
  %v956 = vadd.f32 %v931, %v931
  %v957 = vand.u32 2147483647, %v953
  %v958 = vmul.f32 %v953, %v953
  %v959 = vmul.f32 %v956, %v956
  %v960 = vadd.f32 %v958, %v959
  %v961 = vrsqrt.pop %v960
  %v962 = vmul.f32 %v961, %v960
  %v963 = vmul.f32 %v962, %v961
  %v964 = vmul.f32 0.5, %v963
  %v965 = vsub.f32 1.5, %v964
  %v966 = vmul.f32 %v961, %v965
  %v967 = vmul.f32 %v960, %v966
  %vm968 = vcmp.eq.f32.partialorder %v960, inf
  %v969 = vsel %vm968, %v960, %v967
  %vm970 = vcmp.eq.f32.partialorder %v960, 0.0
  %v971 = vand.u32 %v960, 2147483648
  %v972 = vsel %vm970, %v971, %v969
  %v973 = vadd.f32 %v957, %v972
  %v974 = vadd.f32 %v973, 1e-37
  %v975 = vrcp.pop %v974
  %v976 = vmul.f32 %v974, %v975
  %v977 = vsub.f32 2.0, %v976
  %v978 = vmul.f32 %v975, %v977
  %v979 = vmul.f32 %v956, %v955
  %v980 = vmul.f32 %v979, %v978
  %v981 = vmul.f32 %v980, %v980
  %v982 = vadd.f32 %v981, 1.0
  %v983 = vrsqrt.pop %v982
  %v984 = vmul.f32 %v983, %v982
  %v985 = vmul.f32 %v984, %v983
  %v986 = vmul.f32 0.5, %v985
  %v987 = vsub.f32 1.5, %v986
  %v988 = vmul.f32 %v983, %v987
  %vm989 = vweird.f32 %v982
  %vm990 = vweird.f32 %v983
  %vm991 = vmor %vm989, %vm990
  %v992 = vsel %vm991, %v983, %v988
  %v993 = vmul.f32 %v980, %v992
  %v994 = vmul.f32 %v980, %v931
  %v995 = vsub.f32 %v927, %v994
  %v996 = vadd.f32 %v860, %v994
  %v997 = vmul.f32 %v993, 0.0
  %v998 = vmul.f32 %v992, %v934
  %v999 = vadd.f32 %v997, %v998
  %v1000 = vmul.f32 %v992, %v937
  %v1001 = vmul.f32 %v993, %v872
  %v1002 = vsub.f32 %v1000, %v1001
  %v1003 = vmul.f32 %v993, %v937
  %v1004 = vmul.f32 %v992, %v872
  %v1005 = vadd.f32 %v1003, %v1004
  %v1006 = vmul.f32 %v992, %v943
  %v1007 = vmul.f32 %v993, %v878
  %v1008 = vsub.f32 %v1006, %v1007
  %v1009 = vmul.f32 %v993, %v943
  %v1010 = vmul.f32 %v992, %v878
  %v1011 = vadd.f32 %v1009, %v1010
  %v1012 = vmul.f32 %v992, %v949
  %v1013 = vmul.f32 %v993, %v884
  %v1014 = vsub.f32 %v1012, %v1013
  %v1015 = vmul.f32 %v993, %v949
  %v1016 = vmul.f32 %v992, %v884
  %v1017 = vadd.f32 %v1015, %v1016
  %v1018 = vsub.f32 %v996, %v928
  %vm1019 = vcmp.ge.f32.partialorder %v1018, 0.0
  %v1020 = vsel %vm1019, 1.0, -1.0
  %v1021 = vadd.f32 %v999, %v999
  %v1022 = vand.u32 2147483647, %v1018
  %v1023 = vmul.f32 %v1018, %v1018
  %v1024 = vmul.f32 %v1021, %v1021
  %v1025 = vadd.f32 %v1023, %v1024
  %v1026 = vrsqrt.pop %v1025
  %v1027 = vmul.f32 %v1026, %v1025
  %v1028 = vmul.f32 %v1027, %v1026
  %v1029 = vmul.f32 0.5, %v1028
  %v1030 = vsub.f32 1.5, %v1029
  %v1031 = vmul.f32 %v1026, %v1030
  %v1032 = vmul.f32 %v1025, %v1031
  %vm1033 = vcmp.eq.f32.partialorder %v1025, inf
  %v1034 = vsel %vm1033, %v1025, %v1032
  %vm1035 = vcmp.eq.f32.partialorder %v1025, 0.0
  %v1036 = vand.u32 %v1025, 2147483648
  %v1037 = vsel %vm1035, %v1036, %v1034
  %v1038 = vadd.f32 %v1022, %v1037
  %v1039 = vadd.f32 %v1038, 1e-37
  %v1040 = vrcp.pop %v1039
  %v1041 = vmul.f32 %v1039, %v1040
  %v1042 = vsub.f32 2.0, %v1041
  %v1043 = vmul.f32 %v1040, %v1042
  %v1044 = vmul.f32 %v1021, %v1020
  %v1045 = vmul.f32 %v1044, %v1043
  %v1046 = vmul.f32 %v1045, %v1045
  %v1047 = vadd.f32 %v1046, 1.0
  %v1048 = vrsqrt.pop %v1047
  %v1049 = vmul.f32 %v1048, %v1047
  %v1050 = vmul.f32 %v1049, %v1048
  %v1051 = vmul.f32 0.5, %v1050
  %v1052 = vsub.f32 1.5, %v1051
  %v1053 = vmul.f32 %v1048, %v1052
  %vm1054 = vweird.f32 %v1047
  %vm1055 = vweird.f32 %v1048
  %vm1056 = vmor %vm1054, %vm1055
  %v1057 = vsel %vm1056, %v1048, %v1053
  %v1058 = vmul.f32 %v1045, %v1057
  %v1059 = vmul.f32 %v1045, %v999
  %v1060 = vsub.f32 %v928, %v1059
  %v1061 = vadd.f32 %v996, %v1059
  %v1062 = vmul.f32 %v1057, %v940
  %v1063 = vmul.f32 %v1058, %v1005
  %v1064 = vsub.f32 %v1062, %v1063
  %v1065 = vmul.f32 %v1058, %v940
  %v1066 = vmul.f32 %v1057, %v1005
  %v1067 = vadd.f32 %v1065, %v1066
  %v1068 = vmul.f32 %v1057, %v946
  %v1069 = vmul.f32 %v1058, %v1011
  %v1070 = vsub.f32 %v1068, %v1069
  %v1071 = vmul.f32 %v1058, %v946
  %v1072 = vmul.f32 %v1057, %v1011
  %v1073 = vadd.f32 %v1071, %v1072
  %v1074 = vmul.f32 %v1057, %v952
  %v1075 = vmul.f32 %v1058, %v1017
  %v1076 = vsub.f32 %v1074, %v1075
  %v1077 = vmul.f32 %v1058, %v952
  %v1078 = vmul.f32 %v1057, %v1017
  %v1079 = vadd.f32 %v1077, %v1078
  %vm1080 = vcmp.lt.f32.partialorder %v995, %v1060
  %v1081 = vsel %vm1080, %v1060, %v995
  %v1082 = vsel %vm1080, %v995, %v1060
  %v1083 = vsel %vm1080, %v1064, %v1002
  %v1084 = vsel %vm1080, %v1002, %v1064
  %v1085 = vsel %vm1080, %v1070, %v1008
  %v1086 = vsel %vm1080, %v1008, %v1070
  %v1087 = vsel %vm1080, %v1076, %v1014
  %v1088 = vsel %vm1080, %v1014, %v1076
  %vm1089 = vcmp.lt.f32.partialorder %v1081, %v1061
  %v1090 = vsel %vm1089, %v1061, %v1081
  %v1091 = vsel %vm1089, %v1081, %v1061
  %v1092 = vsel %vm1089, %v1067, %v1083
  %v1093 = vsel %vm1089, %v1083, %v1067
  %v1094 = vsel %vm1089, %v1073, %v1085
  %v1095 = vsel %vm1089, %v1085, %v1073
  %v1096 = vsel %vm1089, %v1079, %v1087
  %v1097 = vsel %vm1089, %v1087, %v1079
  %vm1098 = vcmp.lt.f32.partialorder %v1082, %v1091
  %v1099 = vsel %vm1098, %v1091, %v1082
  %v1100 = vsel %vm1098, %v1082, %v1091
  %v1101 = vsel %vm1098, %v1093, %v1084
  %v1102 = vsel %vm1098, %v1084, %v1093
  %v1103 = vsel %vm1098, %v1095, %v1086
  %v1104 = vsel %vm1098, %v1086, %v1095
  %v1105 = vsel %vm1098, %v1097, %v1088
  %v1106 = vsel %vm1098, %v1088, %v1097
  %v1107 = vmax.f32 %v1090, 1.0135323e-09
  %vm1108 = vcmp.ne.f32.partialorder %v1107, %v1107
  %v1109 = vsel %vm1108, 0.0, %v1107
  %1110 = vst [vmem:[%s2] sm:$0xff] %v1109
  %v1111 = vmax.f32 %v1099, 1.0135323e-09
  %vm1112 = vcmp.ne.f32.partialorder %v1111, %v1111
  %v1113 = vsel %vm1112, 0.0, %v1111
  %s1114 = scalar_lea.vmem %s2, 8
  %1115 = vst [vmem:[%s1114] sm:$0xff] %v1113
  %v1116 = vmax.f32 %v1100, 1.0135323e-09
  %vm1117 = vcmp.ne.f32.partialorder %v1116, %v1116
  %v1118 = vsel %vm1117, 0.0, %v1116
  %s1119 = scalar_lea.vmem %s2, 16
  %1120 = vst [vmem:[%s1119] sm:$0xff] %v1118
  %1121 = vst [vmem:[%s3] sm:$0xff] %v1092
  %s1122 = scalar_lea.vmem %s3, 8
  %1123 = vst [vmem:[%s1122] sm:$0xff] %v1101
  %s1124 = scalar_lea.vmem %s3, 16
  %1125 = vst [vmem:[%s1124] sm:$0xff] %v1102
  %s1126 = scalar_lea.vmem %s3, 24
  %1127 = vst [vmem:[%s1126] sm:$0xff] %v1094
  %s1128 = scalar_lea.vmem %s3, 32
  %1129 = vst [vmem:[%s1128] sm:$0xff] %v1103
  %s1130 = scalar_lea.vmem %s3, 40
  %1131 = vst [vmem:[%s1130] sm:$0xff] %v1104
  %s1132 = scalar_lea.vmem %s3, 48
  %1133 = vst [vmem:[%s1132] sm:$0xff] %v1096
  %s1134 = scalar_lea.vmem %s3, 56
  %1135 = vst [vmem:[%s1134] sm:$0xff] %v1105
  %s1136 = scalar_lea.vmem %s3, 64
  %1137 = vst [vmem:[%s1136] sm:$0xff] %v1106
  // Predicated region
  $region10: #{_lambda_.1} parent=0 // pred_check
    _
  $region11: #{_lambda_.1} parent=0 // pred_check_branch
    %1139 = sbr.rel (0) target = $region13
  $region12: #{_lambda_.1} parent=0 // pred_region
    _
  $region13: #{_lambda_.1} parent=0 // pred_fallthru
    _
  // Predicated region
  $region14: #{_lambda_.1} parent=0 // pred_check
    _
  $region15: #{_lambda_.1} parent=0 // pred_check_branch
    %1141 = sbr.rel (0) target = $region17
  $region16: #{_lambda_.1} parent=0 // pred_region
    _
  $region17: #{_lambda_.1} parent=0 // pred_fallthru
    _
  // Predicated region
  $region18: #{_lambda_.1} parent=0 // pred_check
    _
  $region19: #{_lambda_.1} parent=0 // pred_check_branch
    %1143 = sbr.rel (0) target = $region21
  $region20: #{_lambda_.1} parent=0 // pred_region
    _
  $region21: #{_lambda_.1} parent=0 // pred_fallthru
    _
  // Predicated region
  $region22: #{_lambda_.1} parent=0 // pred_check
    _
  $region23: #{_lambda_.1} parent=0 // pred_check_branch
    %1145 = sbr.rel (0) target = $region25
  $region24: #{_lambda_.1} parent=0 // pred_region
    _
  $region25: #{_lambda_.1} parent=0 // pred_fallthru
    _

</llo_original>
